<compile_context>
chip_gen: v7x
topology: tpu7x:2x2x1
jax: 0.10.0
libtpu: 0.0.40
codegen_flags: <defaults>
</compile_context>

<pallas_src>
import math

import jax
import jax.numpy as jnp
from jax import lax
from jax.experimental import pallas as pl
from jax.experimental.pallas import tpu as pltpu

P_DROP = 0.003  # torch.dropout(attn_weight, 0.003, True)

# TODO(synk): for long sequences, add a KV grid axis with online softmax (flash
# pattern) so the (S,S) score/mask tiles stay within v7x's 64 MiB VMEM.


def _attn_kernel(q_ref, k_ref, v_ref, mask_ref, u_ref, o_ref):
    """Per-(batch, head-group) attention.

    q/k/v : (Hc, S, D) f32
    mask  : (S, S)     f32  (shared across heads; block index constant over the
                             head-group axis, so it is not re-DMA'd per step)
    u     : (Hc, S, S) f32  uniform [0,1) dropout draws
    o     : (Hc, D, S) f32  transposed so minor (lane) dim is S (lane-dense)
    """
    d = q_ref.shape[-1]
    scale = 1.0 / math.sqrt(d)

    # Pre-scale q (an (Hc,S,D) tile) instead of the (Hc,S,S) score tile: S/D fewer VPU mults.
    q = (q_ref[...] * scale).astype(jnp.bfloat16)
    k = k_ref[...].astype(jnp.bfloat16)

    # QK^T via dot_general (contract on D, batch on heads) -> no explicit k.T / XLU transpose.
    s = lax.dot_general(q, k, (((2,), (2,)), ((0,), (0,))),
                        preferred_element_type=jnp.float32)        # (Hc, S, S) f32
    s = s + mask_ref[...][None, :, :]

    # Numerically stable softmax; all elementwise math stays in f32 (v5e has no bf16 VPU/EUP).
    m = jnp.max(s, axis=-1, keepdims=True)
    e = jnp.exp(s - m)
    denom = jnp.sum(e, axis=-1, keepdims=True)

    # Fold the dropout keep-scale 1/(1-p) into the denominator; approx reciprocal -> EUP slot.
    inv = pl.reciprocal(denom * (1.0 - P_DROP), approx=True)       # (Hc, S, 1)
    keep = u_ref[...] >= P_DROP                                    # keep prob = 1 - p
    attn = jnp.where(keep, e * inv, 0.0).astype(jnp.bfloat16)      # (Hc, S, S)

    # P @ V computed with V as LHS so the result comes out (Hc, D, S): the stored minor dim
    # is S (lane-dense), avoiding masked vst on a 16-wide minor dim.
    v = v_ref[...].astype(jnp.bfloat16)
    o = lax.dot_general(v, attn, (((1,), (2,)), ((0,), (0,))),
                        preferred_element_type=jnp.float32)        # (Hc, D, S)
    o_ref[...] = o.astype(o_ref.dtype)


def _pick_head_block(batch, heads, max_hc=8):
    """Largest head-group <= max_hc dividing `heads` that still leaves >= 2 grid steps
    (so both v7x TensorCores get work); otherwise the largest divisor."""
    fallback = 1
    for c in (8, 4, 2, 1):
        if c > max_hc or heads % c:
            continue
        fallback = max(fallback, c)
        if batch * (heads // c) >= 2:
            return c
    return fallback


def sdpa_pallas(query, key, value, attn_mask, *, dropout_key=None):
    B, H, S, D = query.shape
    assert key.shape == (B, H, S, D) and value.shape == (B, H, S, D)
    assert attn_mask.shape == (B, 1, S, S)

    if dropout_key is None:
        dropout_key = jax.random.PRNGKey(0)
    # Dropout randomness precomputed with jax.random (won't bit-match torch's RNG;
    # semantics — keep prob 1-p, rescale by 1/(1-p) — match).
    # TODO(synk): on a real TPU this [B,H,S,S] uniform stream could be generated in-kernel
    # with pltpu.prng_random_bits, but those primitives have no CPU/interpret lowering.
    uniforms = jax.random.uniform(dropout_key, (B, H, S, S), jnp.float32)

    Hc = _pick_head_block(B, H)
    G = H // Hc

    qkv_spec = pl.BlockSpec((None, Hc, S, D), lambda b, g: (b, g, 0, 0))
    mask_spec = pl.BlockSpec((None, None, S, S), lambda b, g: (b, 0, 0, 0))
    u_spec = pl.BlockSpec((None, Hc, S, S), lambda b, g: (b, g, 0, 0))
    # Output produced transposed ([B, H, D, S]) so the stored minor dim is lane-dense.
    out_spec = pl.BlockSpec((None, Hc, D, S), lambda b, g: (b, g, 0, 0))

    out_t = pl.pallas_call(
        _attn_kernel,
        out_shape=jax.ShapeDtypeStruct((B, H, D, S), query.dtype),
        grid=(B, G),
        in_specs=[qkv_spec, qkv_spec, qkv_spec, mask_spec, u_spec],
        out_specs=out_spec,
        compiler_params=pltpu.CompilerParams(
            dimension_semantics=("parallel", "parallel")),
    )(query, key, value, attn_mask, uniforms)

    # Layout plumbing only: return the module's [B, H, S, D].
    return jnp.swapaxes(out_t, -1, -2)


if __name__ == "__main__":
    # Small shapes consistent with the module: q/k/v [batch, heads, seq, dim], mask [batch,1,seq,seq]
    B, H, S, D = 1, 8, 128, 16
    root = jax.random.PRNGKey(0)
    kq, kk, kv, km, kd = jax.random.split(root, 5)
    query = jax.random.normal(kq, (B, H, S, D), jnp.float32)
    key_t = jax.random.normal(kk, (B, H, S, D), jnp.float32)
    value = jax.random.normal(kv, (B, H, S, D), jnp.float32)
    attn_mask = jax.random.normal(km, (B, 1, S, S), jnp.float32)

    out = sdpa_pallas(query, key_t, value, attn_mask, dropout_key=kd)
    out = jax.block_until_ready(out)
    assert out.shape == (B, H, S, D) and out.dtype == jnp.float32
    assert bool(jnp.all(jnp.isfinite(out)))
    print("KERNEL_OK")
</pallas_src>

<mosaic_0001>
module attributes {stable_mosaic.version = 11 : i64} {
  func.func @_attn_kernel(%arg0: i32, %arg1: i32, %arg2: memref<1x4x128x16xf32, #tpu.memory_space<vmem>>, %arg3: memref<1x4x128x16xf32, #tpu.memory_space<vmem>>, %arg4: memref<1x4x128x16xf32, #tpu.memory_space<vmem>>, %arg5: memref<1x1x128x128xf32, #tpu.memory_space<vmem>>, %arg6: memref<1x4x128x128xf32, #tpu.memory_space<vmem>>, %arg7: memref<1x4x16x128xf32, #tpu.memory_space<vmem>>) attributes {dimension_semantics = [#tpu.dimension_semantics<parallel>, #tpu.dimension_semantics<parallel>], iteration_bounds = array<i64: 1, 2>, scalar_prefetch = 0 : i64, scratch_operands = 0 : i64, tpu.core_type = #tpu.core_type<tc>, window_params = [{transform_indices = @transform_0, window_bounds = array<i64: 1, 4, 128, 16>}, {transform_indices = @transform_1, window_bounds = array<i64: 1, 4, 128, 16>}, {transform_indices = @transform_2, window_bounds = array<i64: 1, 4, 128, 16>}, {transform_indices = @transform_3, window_bounds = array<i64: 1, 1, 128, 128>}, {transform_indices = @transform_4, window_bounds = array<i64: 1, 4, 128, 128>}, {transform_indices = @transform_5, window_bounds = array<i64: 1, 4, 16, 128>}]} {
    %c0 = arith.constant 0 : index
    %c0_0 = arith.constant 0 : index
    %c0_1 = arith.constant 0 : index
    %c0_2 = arith.constant 0 : index
    %0 = vector.load %arg2[%c0, %c0_0, %c0_1, %c0_2] : memref<1x4x128x16xf32, #tpu.memory_space<vmem>>, vector<1x4x128x16xf32>
    %1 = vector.shape_cast %0 : vector<1x4x128x16xf32> to vector<4x128x16xf32>
    %cst = arith.constant 2.500000e-01 : f32
    %2 = vector.broadcast %cst : f32 to vector<4x128x16xf32>
    %3 = arith.mulf %1, %2 : vector<4x128x16xf32>
    %4 = arith.truncf %3 : vector<4x128x16xf32> to vector<4x128x16xbf16>
    %c0_3 = arith.constant 0 : index
    %c0_4 = arith.constant 0 : index
    %c0_5 = arith.constant 0 : index
    %c0_6 = arith.constant 0 : index
    %5 = vector.load %arg3[%c0_3, %c0_4, %c0_5, %c0_6] : memref<1x4x128x16xf32, #tpu.memory_space<vmem>>, vector<1x4x128x16xf32>
    %6 = vector.shape_cast %5 : vector<1x4x128x16xf32> to vector<4x128x16xf32>
    %7 = arith.truncf %6 : vector<4x128x16xf32> to vector<4x128x16xbf16>
    %cst_7 = arith.constant dense<0.000000e+00> : vector<4x128x128xf32>
    %8 = tpu.matmul %4, %7, %cst_7 {dimension_numbers = #tpu.dot_dimension_numbers<[2], [2], [1], [1], [0, 0, 0, 1, 1, 1], [0], [0]>} : vector<4x128x16xbf16>, vector<4x128x16xbf16>, vector<4x128x128xf32> -> vector<4x128x128xf32>
    %c0_8 = arith.constant 0 : index
    %c0_9 = arith.constant 0 : index
    %c0_10 = arith.constant 0 : index
    %c0_11 = arith.constant 0 : index
    %9 = vector.load %arg5[%c0_8, %c0_9, %c0_10, %c0_11] : memref<1x1x128x128xf32, #tpu.memory_space<vmem>>, vector<1x1x128x128xf32>
    %10 = vector.shape_cast %9 : vector<1x1x128x128xf32> to vector<128x128xf32>
    %11 = vector.shape_cast %10 : vector<128x128xf32> to vector<1x128x128xf32>
    %12 = vector.broadcast %11 : vector<1x128x128xf32> to vector<4x128x128xf32>
    %13 = arith.addf %8, %12 : vector<4x128x128xf32>
    %cst_12 = arith.constant dense<0xFF800000> : vector<4x128xf32>
    %14 = vector.multi_reduction <maximumf>, %13, %cst_12 [2] : vector<4x128x128xf32> to vector<4x128xf32>
    %15 = vector.shape_cast %14 : vector<4x128xf32> to vector<4x128x1xf32>
    %16 = vector.broadcast %15 : vector<4x128x1xf32> to vector<4x128x128xf32>
    %17 = arith.subf %13, %16 : vector<4x128x128xf32>
    %18 = math.exp %17 : vector<4x128x128xf32>
    %cst_13 = arith.constant dense<0.000000e+00> : vector<4x128xf32>
    %19 = vector.multi_reduction <add>, %18, %cst_13 [2] : vector<4x128x128xf32> to vector<4x128xf32>
    %20 = vector.shape_cast %19 : vector<4x128xf32> to vector<4x128x1xf32>
    %cst_14 = arith.constant 0.996999979 : f32
    %21 = vector.broadcast %cst_14 : f32 to vector<4x128x1xf32>
    %22 = arith.mulf %20, %21 : vector<4x128x1xf32>
    %23 = tpu.reciprocal %22 {approx = true} : vector<4x128x1xf32> -> vector<4x128x1xf32>
    %c0_15 = arith.constant 0 : index
    %c0_16 = arith.constant 0 : index
    %c0_17 = arith.constant 0 : index
    %c0_18 = arith.constant 0 : index
    %24 = vector.load %arg6[%c0_15, %c0_16, %c0_17, %c0_18] : memref<1x4x128x128xf32, #tpu.memory_space<vmem>>, vector<1x4x128x128xf32>
    %25 = vector.shape_cast %24 : vector<1x4x128x128xf32> to vector<4x128x128xf32>
    %cst_19 = arith.constant 3.000000e-03 : f32
    %26 = vector.broadcast %cst_19 : f32 to vector<4x128x128xf32>
    %27 = arith.cmpf oge, %25, %26 : vector<4x128x128xf32>
    %28 = vector.broadcast %23 : vector<4x128x1xf32> to vector<4x128x128xf32>
    %29 = arith.mulf %18, %28 : vector<4x128x128xf32>
    %cst_20 = arith.constant 0.000000e+00 : f32
    %30 = vector.broadcast %cst_20 : f32 to vector<4x128x128xf32>
    %31 = arith.select %27, %29, %30 : vector<4x128x128xi1>, vector<4x128x128xf32>
    %32 = arith.truncf %31 : vector<4x128x128xf32> to vector<4x128x128xbf16>
    %c0_21 = arith.constant 0 : index
    %c0_22 = arith.constant 0 : index
    %c0_23 = arith.constant 0 : index
    %c0_24 = arith.constant 0 : index
    %33 = vector.load %arg4[%c0_21, %c0_22, %c0_23, %c0_24] : memref<1x4x128x16xf32, #tpu.memory_space<vmem>>, vector<1x4x128x16xf32>
    %34 = vector.shape_cast %33 : vector<1x4x128x16xf32> to vector<4x128x16xf32>
    %35 = arith.truncf %34 : vector<4x128x16xf32> to vector<4x128x16xbf16>
    %cst_25 = arith.constant dense<0.000000e+00> : vector<4x16x128xf32>
    %36 = tpu.matmul %35, %32, %cst_25 {dimension_numbers = #tpu.dot_dimension_numbers<[1], [2], [2], [1], [0, 0, 0, 2, 1, 1], [0], [0]>} : vector<4x128x16xbf16>, vector<4x128x128xbf16>, vector<4x16x128xf32> -> vector<4x16x128xf32>
    %c0_26 = arith.constant 0 : index
    %c0_27 = arith.constant 0 : index
    %c0_28 = arith.constant 0 : index
    %c0_29 = arith.constant 0 : index
    %37 = vector.load %arg7[%c0_26, %c0_27, %c0_28, %c0_29] : memref<1x4x16x128xf32, #tpu.memory_space<vmem>>, vector<1x4x16x128xf32>
    %38 = vector.shape_cast %37 : vector<1x4x16x128xf32> to vector<4x16x128xf32>
    %39 = vector.shape_cast %36 : vector<4x16x128xf32> to vector<1x4x16x128xf32>
    tpu.vector_store %arg7[%c0_26, %c0_27, %c0_28, %c0_29], %39 {strides = array<i32>} : memref<1x4x16x128xf32, #tpu.memory_space<vmem>>, vector<1x4x16x128xf32>,
    return
  }
  func.func @transform_0(%arg0: i32, %arg1: i32) -> (i32, i32, i32, i32) {
    %c0_i32 = arith.constant 0 : i32
    %c0_i32_0 = arith.constant 0 : i32
    %c0_i32_1 = arith.constant 0 : i32
    return %arg0, %arg1, %c0_i32, %c0_i32_0 : i32, i32, i32, i32
  }
  func.func @transform_1(%arg0: i32, %arg1: i32) -> (i32, i32, i32, i32) {
    %c0_i32 = arith.constant 0 : i32
    %c0_i32_0 = arith.constant 0 : i32
    %c0_i32_1 = arith.constant 0 : i32
    return %arg0, %arg1, %c0_i32, %c0_i32_0 : i32, i32, i32, i32
  }
  func.func @transform_2(%arg0: i32, %arg1: i32) -> (i32, i32, i32, i32) {
    %c0_i32 = arith.constant 0 : i32
    %c0_i32_0 = arith.constant 0 : i32
    %c0_i32_1 = arith.constant 0 : i32
    return %arg0, %arg1, %c0_i32, %c0_i32_0 : i32, i32, i32, i32
  }
  func.func @transform_3(%arg0: i32, %arg1: i32) -> (i32, i32, i32, i32) {
    %c0_i32 = arith.constant 0 : i32
    %c0_i32_0 = arith.constant 0 : i32
    %c0_i32_1 = arith.constant 0 : i32
    %c0_i32_2 = arith.constant 0 : i32
    return %arg0, %c0_i32, %c0_i32_0, %c0_i32_1 : i32, i32, i32, i32
  }
  func.func @transform_4(%arg0: i32, %arg1: i32) -> (i32, i32, i32, i32) {
    %c0_i32 = arith.constant 0 : i32
    %c0_i32_0 = arith.constant 0 : i32
    %c0_i32_1 = arith.constant 0 : i32
    return %arg0, %arg1, %c0_i32, %c0_i32_0 : i32, i32, i32, i32
  }
  func.func @transform_5(%arg0: i32, %arg1: i32) -> (i32, i32, i32, i32) {
    %c0_i32 = arith.constant 0 : i32
    %c0_i32_0 = arith.constant 0 : i32
    %c0_i32_1 = arith.constant 0 : i32
    return %arg0, %arg1, %c0_i32, %c0_i32_0 : i32, i32, i32, i32
  }
}

</mosaic_0001>

<llo_original>
// kernel: tpu_custom_call.1
$region0: #{tpu_custom_call.1}
  #allocation0 [shape = 'u32[]', space=smem, size = 0x4, offset = 0x4, fixed_abs, tag = 'smem constant byte address 0x4 - core index']
  #allocation1 [shape = 'u32[144,128]{1,0:T(1,128)}', space=vmem, size = 0x12000, scoped, tag = 'internal scratch']
  %s0 = inlined_call_operand.vmem [shape: f32[1,8,128,16], index: 0, kind: input, shape index: {}]
  %s1 = inlined_call_operand.vmem [shape: f32[1,8,128,16], index: 1, kind: input, shape index: {}]
  %s2 = inlined_call_operand.vmem [shape: f32[1,8,128,16], index: 2, kind: input, shape index: {}]
  %s3 = inlined_call_operand.vmem [shape: f32[1,1,128,128], index: 3, kind: input, shape index: {}]
  %s4 = inlined_call_operand.vmem [shape: f32[1,8,128,128], index: 4, kind: input, shape index: {}]
  %s5 = inlined_call_operand.hbm [shape: f32[1,8,16,128], index: 5, kind: output, shape index: {}]
  %s6 = sld [smem:[#allocation0]]
  $region53: #{tpu_custom_call.1} parent=0
    _
  %s8 = ssub.s32 1, %s6
  %s9 = scalar_select 0, %s8, %s6
  $region1: #{tpu_custom_call.1} parent=0
    #allocation2 [shape = 'u8[65536]{0}', space=vmem, size = 0x10000, scoped, tag = 'output window, operand 0']
    #allocation3 [shape = 's32[2]{0}', space=sflag, size = 0x8, scoped, tag = 'scoped memory for tpu_custom_call.1']
    %10 = vsyncpa [#allocation3], 0
    %s11 = scalar_lea.sflag [#allocation3], 1
    %12 = vsyncpa %s11, 0
    loop: start=0, step=1, limit=4
    $region2: #{tpu_custom_call.1} parent=1 // loop_pre_header
      _
    $region3: #{tpu_custom_call.1} parent=1 // loop_header
      %s14 = sphi 0, %s18
      %p15 = scmp.ge.s32.totalorder %s14, 4
      %s21 = sphi 0, %s33
      %s22 = sphi 0, %s29
      %s23 = sphi 0, %s21
      %s24 = sphi 0, %s22
      %s25 = sphi 0, %s23
      %s26 = sphi 0, %s24
      %s38 = sphi 0, %s40
      %s41 = sphi 0, %s38
      %s42 = sphi 0, %s41
      %s58 = sphi 0, %s42
      %s66 = sphi 0, %s68
      %s69 = sphi 0, %s66
      %s70 = sphi 0, %s69
      %s86 = sphi 0, %s70
      %s94 = sphi 0, %s96
      %s97 = sphi 0, %s94
      %s98 = sphi 0, %s97
      %s114 = sphi 0, %s98
      %s120 = sphi 0, %s122
      %s123 = sphi 0, %s120
      %s124 = sphi 0, %s123
      %s140 = sphi 0, %s124
      %s148 = sphi 0, %s150
      %s151 = sphi 0, %s148
      %s152 = sphi 0, %s151
      %s168 = sphi 0, %s152
      %s176 = sphi 0, %s178
      %s179 = sphi 0, %s176
      %s180 = sphi 0, %s179
      %s196 = sphi 0, %s180
    $region4: #{tpu_custom_call.1} parent=1 // loop_header_branch
      %17 = sbr.rel (%p15) target = $region8
    $region5: #{tpu_custom_call.1} parent=1 // loop_body
      %s19 = ssub.s32 %s14, 1
      %s20 = ssub.s32 %s14, 2
      %s27 = sadd.s32 1, %s22
      %p28 = scmp.ge.s32.totalorder %s27, 2
      %s29 = scalar_select %p28, 0, %s27
      %s30 = sadd.s32 1, %s21
      %s31 = scalar_select %p28, %s30, %s21
      %p32 = scmp.ge.s32.totalorder %s31, 1
      %s33 = scalar_select %p32, 0, %s31
      %s34 = ssub.s32 %s21, %s33
      %s35 = ssub.s32 %s22, %s29
      %s36 = sor.u32 %s34, %s35
      %p37 = scmp.eq.s32.totalorder %s36, 0
      %s39 = sadd.s32 %s38, 1
      %s40 = scalar_select %p37, %s38, %s39
      %p43 = pneg %p37
      %p44 = scmp.eq.s32.totalorder %s14, 1
      %p45 = por %p43, %p44
      %p46 = scmp.ne.s32.totalorder %s38, %s41
      %p47 = scmp.eq.s32.totalorder %s14, 0
      %p48 = por %p46, %p47
      %p49 = scmp.ne.s32.totalorder %s38, %s41
      %p50 = scmp.eq.s32.totalorder %s19, 1
      %p51 = por %p49, %p50
      %p52 = scmp.ne.s32.totalorder %s41, %s42
      %p53 = scmp.eq.s32.totalorder %s19, 0
      %p54 = por %p52, %p53
      %p55 = scmp.ne.s32.totalorder %s41, %s42
      %p56 = scmp.eq.s32.totalorder %s20, 1
      %p57 = por %p55, %p56
      %p59 = scmp.ne.s32.totalorder %s42, %s58
      %p60 = scmp.eq.s32.totalorder %s20, 0
      %p61 = por %p59, %p60
      %s62 = ssub.s32 %s21, %s33
      %s63 = ssub.s32 %s22, %s29
      %s64 = sor.u32 %s62, %s63
      %p65 = scmp.eq.s32.totalorder %s64, 0
      %s67 = sadd.s32 %s66, 1
      %s68 = scalar_select %p65, %s66, %s67
      %p71 = pneg %p65
      %p72 = scmp.eq.s32.totalorder %s14, 1
      %p73 = por %p71, %p72
      %p74 = scmp.ne.s32.totalorder %s66, %s69
      %p75 = scmp.eq.s32.totalorder %s14, 0
      %p76 = por %p74, %p75
      %p77 = scmp.ne.s32.totalorder %s66, %s69
      %p78 = scmp.eq.s32.totalorder %s19, 1
      %p79 = por %p77, %p78
      %p80 = scmp.ne.s32.totalorder %s69, %s70
      %p81 = scmp.eq.s32.totalorder %s19, 0
      %p82 = por %p80, %p81
      %p83 = scmp.ne.s32.totalorder %s69, %s70
      %p84 = scmp.eq.s32.totalorder %s20, 1
      %p85 = por %p83, %p84
      %p87 = scmp.ne.s32.totalorder %s70, %s86
      %p88 = scmp.eq.s32.totalorder %s20, 0
      %p89 = por %p87, %p88
      %s90 = ssub.s32 %s21, %s33
      %s91 = ssub.s32 %s22, %s29
      %s92 = sor.u32 %s90, %s91
      %p93 = scmp.eq.s32.totalorder %s92, 0
      %s95 = sadd.s32 %s94, 1
      %s96 = scalar_select %p93, %s94, %s95
      %p99 = pneg %p93
      %p100 = scmp.eq.s32.totalorder %s14, 1
      %p101 = por %p99, %p100
      %p102 = scmp.ne.s32.totalorder %s94, %s97
      %p103 = scmp.eq.s32.totalorder %s14, 0
      %p104 = por %p102, %p103
      %p105 = scmp.ne.s32.totalorder %s94, %s97
      %p106 = scmp.eq.s32.totalorder %s19, 1
      %p107 = por %p105, %p106
      %p108 = scmp.ne.s32.totalorder %s97, %s98
      %p109 = scmp.eq.s32.totalorder %s19, 0
      %p110 = por %p108, %p109
      %p111 = scmp.ne.s32.totalorder %s97, %s98
      %p112 = scmp.eq.s32.totalorder %s20, 1
      %p113 = por %p111, %p112
      %p115 = scmp.ne.s32.totalorder %s98, %s114
      %p116 = scmp.eq.s32.totalorder %s20, 0
      %p117 = por %p115, %p116
      %s118 = ssub.s32 %s21, %s33
      %p119 = scmp.eq.s32.totalorder %s118, 0
      %s121 = sadd.s32 %s120, 1
      %s122 = scalar_select %p119, %s120, %s121
      %p125 = pneg %p119
      %p126 = scmp.eq.s32.totalorder %s14, 1
      %p127 = por %p125, %p126
      %p128 = scmp.ne.s32.totalorder %s120, %s123
      %p129 = scmp.eq.s32.totalorder %s14, 0
      %p130 = por %p128, %p129
      %p131 = scmp.ne.s32.totalorder %s120, %s123
      %p132 = scmp.eq.s32.totalorder %s19, 1
      %p133 = por %p131, %p132
      %p134 = scmp.ne.s32.totalorder %s123, %s124
      %p135 = scmp.eq.s32.totalorder %s19, 0
      %p136 = por %p134, %p135
      %p137 = scmp.ne.s32.totalorder %s123, %s124
      %p138 = scmp.eq.s32.totalorder %s20, 1
      %p139 = por %p137, %p138
      %p141 = scmp.ne.s32.totalorder %s124, %s140
      %p142 = scmp.eq.s32.totalorder %s20, 0
      %p143 = por %p141, %p142
      %s144 = ssub.s32 %s21, %s33
      %s145 = ssub.s32 %s22, %s29
      %s146 = sor.u32 %s144, %s145
      %p147 = scmp.eq.s32.totalorder %s146, 0
      %s149 = sadd.s32 %s148, 1
      %s150 = scalar_select %p147, %s148, %s149
      %p153 = pneg %p147
      %p154 = scmp.eq.s32.totalorder %s14, 1
      %p155 = por %p153, %p154
      %p156 = scmp.ne.s32.totalorder %s148, %s151
      %p157 = scmp.eq.s32.totalorder %s14, 0
      %p158 = por %p156, %p157
      %p159 = scmp.ne.s32.totalorder %s148, %s151
      %p160 = scmp.eq.s32.totalorder %s19, 1
      %p161 = por %p159, %p160
      %p162 = scmp.ne.s32.totalorder %s151, %s152
      %p163 = scmp.eq.s32.totalorder %s19, 0
      %p164 = por %p162, %p163
      %p165 = scmp.ne.s32.totalorder %s151, %s152
      %p166 = scmp.eq.s32.totalorder %s20, 1
      %p167 = por %p165, %p166
      %p169 = scmp.ne.s32.totalorder %s152, %s168
      %p170 = scmp.eq.s32.totalorder %s20, 0
      %p171 = por %p169, %p170
      %s172 = ssub.s32 %s21, %s33
      %s173 = ssub.s32 %s22, %s29
      %s174 = sor.u32 %s172, %s173
      %p175 = scmp.eq.s32.totalorder %s174, 0
      %s177 = sadd.s32 %s176, 1
      %s178 = scalar_select %p175, %s176, %s177
      %p181 = pneg %p175
      %p182 = scmp.eq.s32.totalorder %s14, 1
      %p183 = por %p181, %p182
      %p184 = scmp.ne.s32.totalorder %s176, %s179
      %p185 = scmp.eq.s32.totalorder %s14, 0
      %p186 = por %p184, %p185
      %p187 = scmp.ne.s32.totalorder %s176, %s179
      %p188 = scmp.eq.s32.totalorder %s19, 1
      %p189 = por %p187, %p188
      %p190 = scmp.ne.s32.totalorder %s179, %s180
      %p191 = scmp.eq.s32.totalorder %s19, 0
      %p192 = por %p190, %p191
      %p193 = scmp.ne.s32.totalorder %s179, %s180
      %p194 = scmp.eq.s32.totalorder %s20, 1
      %p195 = por %p193, %p194
      %p197 = scmp.ne.s32.totalorder %s180, %s196
      %p198 = scmp.eq.s32.totalorder %s20, 0
      %p199 = por %p197, %p198
      %p200 = scmp.le.s32.totalorder 1, %s14
      %p201 = scmp.lt.s32.totalorder %s14, 3
      %p202 = pnand %p200, %p201
      %p203 = pneg %p202
      // Predicated region
      $region9: #{tpu_custom_call.1} parent=5 // pred_check
        _
      $region10: #{tpu_custom_call.1} parent=5 // pred_check_branch
        %205 = sbr.rel (%p202) target = $region12
      $region11: #{tpu_custom_call.1} parent=5 // pred_region
        %s206 = ssub.s32 %s14, 1
        // Predicated region
        $region13: #{tpu_custom_call.1} parent=11 // pred_check
          %p207 = pneg %p136
        $region14: #{tpu_custom_call.1} parent=11 // pred_check_branch
          %209 = sbr.rel (%p207) target = $region16
        $region15: #{tpu_custom_call.1} parent=11 // pred_region
          %p210 = scmp.lt.s32.totalorder %s23, 0
          %s211 = scalar_select %p210, %s23, 0
          %s212 = smul.addr %s211, 16
          %s213 = smul.addr %s212, 8
          %s214 = scalar_lea.vmem %s3, %s213
        $region16: #{tpu_custom_call.1} parent=11 // pred_fallthru
          _
      $region12: #{tpu_custom_call.1} parent=5 // pred_fallthru
        _
      %p215 = scmp.lt.s32.totalorder %s14, 2
      // Predicated region
      $region17: #{tpu_custom_call.1} parent=5 // pred_check
        %p216 = pneg %p215
      $region18: #{tpu_custom_call.1} parent=5 // pred_check_branch
        %218 = sbr.rel (%p216) target = $region20
      $region19: #{tpu_custom_call.1} parent=5 // pred_region
        // Predicated region
        $region21: #{tpu_custom_call.1} parent=19 // pred_check
          %p219 = pneg %p48
        $region22: #{tpu_custom_call.1} parent=19 // pred_check_branch
          %221 = sbr.rel (%p219) target = $region24
        $region23: #{tpu_custom_call.1} parent=19 // pred_region
          %s222 = smul.u32 4, %s22
          %p223 = scmp.lt.s32.totalorder %s21, 0
          %s224 = scalar_select %p223, %s21, 0
          %p225 = scmp.lt.s32.totalorder %s222, 7
          %s226 = scalar_select %p225, %s222, 7
          %s227 = smul.addr %s226, 16
          %s228 = smul.addr %s224, 128
          %s229 = sadd.s32 %s227, %s228
          %s230 = smul.addr %s229, 8
          %s231 = scalar_lea.vmem %s0, %s230
          %s232 = smul.u32 4, %s22
        $region24: #{tpu_custom_call.1} parent=19 // pred_fallthru
          _
        // Predicated region
        $region25: #{tpu_custom_call.1} parent=19 // pred_check
          %p233 = pneg %p76
        $region26: #{tpu_custom_call.1} parent=19 // pred_check_branch
          %235 = sbr.rel (%p233) target = $region28
        $region27: #{tpu_custom_call.1} parent=19 // pred_region
          %s236 = smul.u32 4, %s22
          %p237 = scmp.lt.s32.totalorder %s21, 0
          %s238 = scalar_select %p237, %s21, 0
          %p239 = scmp.lt.s32.totalorder %s236, 7
          %s240 = scalar_select %p239, %s236, 7
          %s241 = smul.addr %s240, 16
          %s242 = smul.addr %s238, 128
          %s243 = sadd.s32 %s241, %s242
          %s244 = smul.addr %s243, 8
          %s245 = scalar_lea.vmem %s1, %s244
          %s246 = smul.u32 4, %s22
        $region28: #{tpu_custom_call.1} parent=19 // pred_fallthru
          _
        // Predicated region
        $region29: #{tpu_custom_call.1} parent=19 // pred_check
          %p247 = pneg %p104
        $region30: #{tpu_custom_call.1} parent=19 // pred_check_branch
          %249 = sbr.rel (%p247) target = $region32
        $region31: #{tpu_custom_call.1} parent=19 // pred_region
          %s250 = smul.u32 4, %s22
          %p251 = scmp.lt.s32.totalorder %s21, 0
          %s252 = scalar_select %p251, %s21, 0
          %p253 = scmp.lt.s32.totalorder %s250, 7
          %s254 = scalar_select %p253, %s250, 7
          %s255 = smul.addr %s254, 16
          %s256 = smul.addr %s252, 128
          %s257 = sadd.s32 %s255, %s256
          %s258 = smul.addr %s257, 8
          %s259 = scalar_lea.vmem %s2, %s258
          %s260 = smul.u32 4, %s22
        $region32: #{tpu_custom_call.1} parent=19 // pred_fallthru
          _
        // Predicated region
        $region33: #{tpu_custom_call.1} parent=19 // pred_check
          %p261 = pneg %p158
        $region34: #{tpu_custom_call.1} parent=19 // pred_check_branch
          %263 = sbr.rel (%p261) target = $region36
        $region35: #{tpu_custom_call.1} parent=19 // pred_region
          %s264 = smul.u32 4, %s22
          %p265 = scmp.lt.s32.totalorder %s21, 0
          %s266 = scalar_select %p265, %s21, 0
          %p267 = scmp.lt.s32.totalorder %s264, 7
          %s268 = scalar_select %p267, %s264, 7
          %s269 = smul.addr %s268, 16
          %s270 = smul.addr %s266, 128
          %s271 = sadd.s32 %s269, %s270
          %s272 = smul.addr %s271, 8
          %s273 = scalar_lea.vmem %s4, %s272
          %s274 = smul.u32 4, %s22
        $region36: #{tpu_custom_call.1} parent=19 // pred_fallthru
          _
      $region20: #{tpu_custom_call.1} parent=5 // pred_fallthru
        _
      %p275 = scmp.le.s32.totalorder 1, %s14
      %p276 = scmp.lt.s32.totalorder %s14, 3
      %p277 = pnand %p275, %p276
      %p278 = pneg %p277
      // Predicated region
      $region37: #{tpu_custom_call.1} parent=5 // pred_check
        _
      $region38: #{tpu_custom_call.1} parent=5 // pred_check_branch
        %280 = sbr.rel (%p277) target = $region40
      $region39: #{tpu_custom_call.1} parent=5 // pred_region
        %s281 = ssub.s32 %s14, 1
        %s282 = smul.u32 4, %s24
        %p283 = scmp.lt.s32.totalorder %s23, 0
        %s284 = scalar_select %p283, %s23, 0
        %p285 = scmp.lt.s32.totalorder %s282, 7
        %s286 = scalar_select %p285, %s282, 7
        %s287 = smul.addr %s286, 16
        %s288 = smul.addr %s284, 128
        %s289 = sadd.s32 %s287, %s288
        %s290 = smul.addr %s289, 8
        %s291 = scalar_lea.vmem %s0, %s290
        %p292 = pneg %p54
        %p293 = pneg %p51
        %s294 = smul.u32 4, %s24
        %p295 = scmp.lt.s32.totalorder %s23, 0
        %s296 = scalar_select %p295, %s23, 0
        %p297 = scmp.lt.s32.totalorder %s294, 7
        %s298 = scalar_select %p297, %s294, 7
        %s299 = smul.addr %s298, 16
        %s300 = smul.addr %s296, 128
        %s301 = sadd.s32 %s299, %s300
        %s302 = smul.addr %s301, 8
        %s303 = scalar_lea.vmem %s1, %s302
        %p304 = pneg %p82
        %p305 = pneg %p79
        %s306 = smul.u32 4, %s24
        %p307 = scmp.lt.s32.totalorder %s23, 0
        %s308 = scalar_select %p307, %s23, 0
        %p309 = scmp.lt.s32.totalorder %s306, 7
        %s310 = scalar_select %p309, %s306, 7
        %s311 = smul.addr %s310, 16
        %s312 = smul.addr %s308, 128
        %s313 = sadd.s32 %s311, %s312
        %s314 = smul.addr %s313, 8
        %s315 = scalar_lea.vmem %s2, %s314
        %p316 = pneg %p110
        %p317 = pneg %p107
        %p318 = scmp.lt.s32.totalorder %s23, 0
        %s319 = scalar_select %p318, %s23, 0
        %s320 = smul.addr %s319, 16
        %s321 = smul.addr %s320, 8
        %s322 = scalar_lea.vmem %s3, %s321
        %p323 = pneg %p136
        %p324 = pneg %p133
        %s325 = smul.u32 4, %s24
        %p326 = scmp.lt.s32.totalorder %s23, 0
        %s327 = scalar_select %p326, %s23, 0
        %p328 = scmp.lt.s32.totalorder %s325, 7
        %s329 = scalar_select %p328, %s325, 7
        %s330 = smul.addr %s329, 16
        %s331 = smul.addr %s327, 128
        %s332 = sadd.s32 %s330, %s331
        %s333 = smul.addr %s332, 8
        %s334 = scalar_lea.vmem %s4, %s333
        %p335 = pneg %p164
        %p336 = pneg %p161
        %p337 = pneg %p192
        %p338 = pneg %p189
        %s339 = sand.u32 %s179, 1
        %s340 = scalar_lea.sflag [#allocation3], %s339
        %s341 = sand.u32 %s179, 1
        %s342 = smul.addr %s341, 64
        %s343 = scalar_lea.vmem [#allocation2], %s342
        %s344 = smul.u32 4, %s24
        %p345 = scmp.lt.s32.totalorder %s23, 0
        %s346 = scalar_select %p345, %s23, 0
        %p347 = scmp.lt.s32.totalorder %s344, 7
        %s348 = scalar_select %p347, %s344, 7
        %s349 = smul.addr %s348, 16
        %s350 = smul.addr %s346, 128
        %s351 = sadd.s32 %s349, %s350
        %s352 = smul.addr %s351, 8
        %s353 = scalar_lea.vmem %s0, %s352
        %s354 = smul.u32 4, %s24
        %s355 = smul.u32 4, %s24
        %p356 = scmp.lt.s32.totalorder %s23, 0
        %s357 = scalar_select %p356, %s23, 0
        %p358 = scmp.lt.s32.totalorder %s355, 7
        %s359 = scalar_select %p358, %s355, 7
        %s360 = smul.addr %s359, 16
        %s361 = smul.addr %s357, 128
        %s362 = sadd.s32 %s360, %s361
        %s363 = smul.addr %s362, 8
        %s364 = scalar_lea.vmem %s1, %s363
        %s365 = smul.u32 4, %s24
        %s366 = smul.u32 4, %s24
        %p367 = scmp.lt.s32.totalorder %s23, 0
        %s368 = scalar_select %p367, %s23, 0
        %p369 = scmp.lt.s32.totalorder %s366, 7
        %s370 = scalar_select %p369, %s366, 7
        %s371 = smul.addr %s370, 16
        %s372 = smul.addr %s368, 128
        %s373 = sadd.s32 %s371, %s372
        %s374 = smul.addr %s373, 8
        %s375 = scalar_lea.vmem %s2, %s374
        %s376 = smul.u32 4, %s24
        %p377 = scmp.lt.s32.totalorder %s23, 0
        %s378 = scalar_select %p377, %s23, 0
        %s379 = smul.addr %s378, 16
        %s380 = smul.addr %s379, 8
        %s381 = scalar_lea.vmem %s3, %s380
        %s382 = smul.u32 4, %s24
        %p383 = scmp.lt.s32.totalorder %s23, 0
        %s384 = scalar_select %p383, %s23, 0
        %p385 = scmp.lt.s32.totalorder %s382, 7
        %s386 = scalar_select %p385, %s382, 7
        %s387 = smul.addr %s386, 16
        %s388 = smul.addr %s384, 128
        %s389 = sadd.s32 %s387, %s388
        %s390 = smul.addr %s389, 8
        %s391 = scalar_lea.vmem %s4, %s390
        %s392 = smul.u32 4, %s24
        %s393 = smul.u32 4, %s24
        %v395 = vld [vmem:[%s353] sm:$0xff]
        %v396 = vld [vmem:[%s353 + $0x8] sm:$0xff]
        %v397 = vld [vmem:[%s353 + $0x10] sm:$0xff]
        %v398 = vld [vmem:[%s353 + $0x18] sm:$0xff]
        %v399 = vld [vmem:[%s353 + $0x20] sm:$0xff]
        %v400 = vld [vmem:[%s353 + $0x28] sm:$0xff]
        %v401 = vld [vmem:[%s353 + $0x30] sm:$0xff]
        %v402 = vld [vmem:[%s353 + $0x38] sm:$0xff]
        %v403 = vld [vmem:[%s353 + $0x40] sm:$0xff]
        %v404 = vld [vmem:[%s353 + $0x48] sm:$0xff]
        %v405 = vld [vmem:[%s353 + $0x50] sm:$0xff]
        %v406 = vld [vmem:[%s353 + $0x58] sm:$0xff]
        %v407 = vld [vmem:[%s353 + $0x60] sm:$0xff]
        %v408 = vld [vmem:[%s353 + $0x68] sm:$0xff]
        %v409 = vld [vmem:[%s353 + $0x70] sm:$0xff]
        %v410 = vld [vmem:[%s353 + $0x78] sm:$0xff]
        %v411 = vld [vmem:[%s353 + $0x80] sm:$0xff]
        %v412 = vld [vmem:[%s353 + $0x88] sm:$0xff]
        %v413 = vld [vmem:[%s353 + $0x90] sm:$0xff]
        %v414 = vld [vmem:[%s353 + $0x98] sm:$0xff]
        %v415 = vld [vmem:[%s353 + $0xa0] sm:$0xff]
        %v416 = vld [vmem:[%s353 + $0xa8] sm:$0xff]
        %v417 = vld [vmem:[%s353 + $0xb0] sm:$0xff]
        %v418 = vld [vmem:[%s353 + $0xb8] sm:$0xff]
        %v419 = vld [vmem:[%s353 + $0xc0] sm:$0xff]
        %v420 = vld [vmem:[%s353 + $0xc8] sm:$0xff]
        %v421 = vld [vmem:[%s353 + $0xd0] sm:$0xff]
        %v422 = vld [vmem:[%s353 + $0xd8] sm:$0xff]
        %v423 = vld [vmem:[%s353 + $0xe0] sm:$0xff]
        %v424 = vld [vmem:[%s353 + $0xe8] sm:$0xff]
        %v425 = vld [vmem:[%s353 + $0xf0] sm:$0xff]
        %v426 = vld [vmem:[%s353 + $0xf8] sm:$0xff]
        %v427 = vld [vmem:[%s353 + $0x100] sm:$0xff]
        %v428 = vld [vmem:[%s353 + $0x108] sm:$0xff]
        %v429 = vld [vmem:[%s353 + $0x110] sm:$0xff]
        %v430 = vld [vmem:[%s353 + $0x118] sm:$0xff]
        %v431 = vld [vmem:[%s353 + $0x120] sm:$0xff]
        %v432 = vld [vmem:[%s353 + $0x128] sm:$0xff]
        %v433 = vld [vmem:[%s353 + $0x130] sm:$0xff]
        %v434 = vld [vmem:[%s353 + $0x138] sm:$0xff]
        %v435 = vld [vmem:[%s353 + $0x140] sm:$0xff]
        %v436 = vld [vmem:[%s353 + $0x148] sm:$0xff]
        %v437 = vld [vmem:[%s353 + $0x150] sm:$0xff]
        %v438 = vld [vmem:[%s353 + $0x158] sm:$0xff]
        %v439 = vld [vmem:[%s353 + $0x160] sm:$0xff]
        %v440 = vld [vmem:[%s353 + $0x168] sm:$0xff]
        %v441 = vld [vmem:[%s353 + $0x170] sm:$0xff]
        %v442 = vld [vmem:[%s353 + $0x178] sm:$0xff]
        %v443 = vld [vmem:[%s353 + $0x180] sm:$0xff]
        %v444 = vld [vmem:[%s353 + $0x188] sm:$0xff]
        %v445 = vld [vmem:[%s353 + $0x190] sm:$0xff]
        %v446 = vld [vmem:[%s353 + $0x198] sm:$0xff]
        %v447 = vld [vmem:[%s353 + $0x1a0] sm:$0xff]
        %v448 = vld [vmem:[%s353 + $0x1a8] sm:$0xff]
        %v449 = vld [vmem:[%s353 + $0x1b0] sm:$0xff]
        %v450 = vld [vmem:[%s353 + $0x1b8] sm:$0xff]
        %v451 = vld [vmem:[%s353 + $0x1c0] sm:$0xff]
        %v452 = vld [vmem:[%s353 + $0x1c8] sm:$0xff]
        %v453 = vld [vmem:[%s353 + $0x1d0] sm:$0xff]
        %v454 = vld [vmem:[%s353 + $0x1d8] sm:$0xff]
        %v455 = vld [vmem:[%s353 + $0x1e0] sm:$0xff]
        %v456 = vld [vmem:[%s353 + $0x1e8] sm:$0xff]
        %v457 = vld [vmem:[%s353 + $0x1f0] sm:$0xff]
        %v458 = vld [vmem:[%s353 + $0x1f8] sm:$0xff]
        %v459 = vmul.f32 %v395, 0.25
        %v460 = vmul.f32 %v396, 0.25
        %v461 = vmul.f32 %v397, 0.25
        %v462 = vmul.f32 %v398, 0.25
        %v463 = vmul.f32 %v399, 0.25
        %v464 = vmul.f32 %v400, 0.25
        %v465 = vmul.f32 %v401, 0.25
        %v466 = vmul.f32 %v402, 0.25
        %v467 = vmul.f32 %v403, 0.25
        %v468 = vmul.f32 %v404, 0.25
        %v469 = vmul.f32 %v405, 0.25
        %v470 = vmul.f32 %v406, 0.25
        %v471 = vmul.f32 %v407, 0.25
        %v472 = vmul.f32 %v408, 0.25
        %v473 = vmul.f32 %v409, 0.25
        %v474 = vmul.f32 %v410, 0.25
        %v475 = vmul.f32 %v411, 0.25
        %v476 = vmul.f32 %v412, 0.25
        %v477 = vmul.f32 %v413, 0.25
        %v478 = vmul.f32 %v414, 0.25
        %v479 = vmul.f32 %v415, 0.25
        %v480 = vmul.f32 %v416, 0.25
        %v481 = vmul.f32 %v417, 0.25
        %v482 = vmul.f32 %v418, 0.25
        %v483 = vmul.f32 %v419, 0.25
        %v484 = vmul.f32 %v420, 0.25
        %v485 = vmul.f32 %v421, 0.25
        %v486 = vmul.f32 %v422, 0.25
        %v487 = vmul.f32 %v423, 0.25
        %v488 = vmul.f32 %v424, 0.25
        %v489 = vmul.f32 %v425, 0.25
        %v490 = vmul.f32 %v426, 0.25
        %v491 = vmul.f32 %v427, 0.25
        %v492 = vmul.f32 %v428, 0.25
        %v493 = vmul.f32 %v429, 0.25
        %v494 = vmul.f32 %v430, 0.25
        %v495 = vmul.f32 %v431, 0.25
        %v496 = vmul.f32 %v432, 0.25
        %v497 = vmul.f32 %v433, 0.25
        %v498 = vmul.f32 %v434, 0.25
        %v499 = vmul.f32 %v435, 0.25
        %v500 = vmul.f32 %v436, 0.25
        %v501 = vmul.f32 %v437, 0.25
        %v502 = vmul.f32 %v438, 0.25
        %v503 = vmul.f32 %v439, 0.25
        %v504 = vmul.f32 %v440, 0.25
        %v505 = vmul.f32 %v441, 0.25
        %v506 = vmul.f32 %v442, 0.25
        %v507 = vmul.f32 %v443, 0.25
        %v508 = vmul.f32 %v444, 0.25
        %v509 = vmul.f32 %v445, 0.25
        %v510 = vmul.f32 %v446, 0.25
        %v511 = vmul.f32 %v447, 0.25
        %v512 = vmul.f32 %v448, 0.25
        %v513 = vmul.f32 %v449, 0.25
        %v514 = vmul.f32 %v450, 0.25
        %v515 = vmul.f32 %v451, 0.25
        %v516 = vmul.f32 %v452, 0.25
        %v517 = vmul.f32 %v453, 0.25
        %v518 = vmul.f32 %v454, 0.25
        %v519 = vmul.f32 %v455, 0.25
        %v520 = vmul.f32 %v456, 0.25
        %v521 = vmul.f32 %v457, 0.25
        %v522 = vmul.f32 %v458, 0.25
        %v523 = vpack.c.bf16 %v460, %v459
        %v524 = vpack.c.bf16 %v462, %v461
        %v525 = vpack.c.bf16 %v464, %v463
        %v526 = vpack.c.bf16 %v466, %v465
        %v527 = vpack.c.bf16 %v468, %v467
        %v528 = vpack.c.bf16 %v470, %v469
        %v529 = vpack.c.bf16 %v472, %v471
        %v530 = vpack.c.bf16 %v474, %v473
        %v531 = vpack.c.bf16 %v476, %v475
        %v532 = vpack.c.bf16 %v478, %v477
        %v533 = vpack.c.bf16 %v480, %v479
        %v534 = vpack.c.bf16 %v482, %v481
        %v535 = vpack.c.bf16 %v484, %v483
        %v536 = vpack.c.bf16 %v486, %v485
        %v537 = vpack.c.bf16 %v488, %v487
        %v538 = vpack.c.bf16 %v490, %v489
        %v539 = vpack.c.bf16 %v492, %v491
        %v540 = vpack.c.bf16 %v494, %v493
        %v541 = vpack.c.bf16 %v496, %v495
        %v542 = vpack.c.bf16 %v498, %v497
        %v543 = vpack.c.bf16 %v500, %v499
        %v544 = vpack.c.bf16 %v502, %v501
        %v545 = vpack.c.bf16 %v504, %v503
        %v546 = vpack.c.bf16 %v506, %v505
        %v547 = vpack.c.bf16 %v508, %v507
        %v548 = vpack.c.bf16 %v510, %v509
        %v549 = vpack.c.bf16 %v512, %v511
        %v550 = vpack.c.bf16 %v514, %v513
        %v551 = vpack.c.bf16 %v516, %v515
        %v552 = vpack.c.bf16 %v518, %v517
        %v553 = vpack.c.bf16 %v520, %v519
        %v554 = vpack.c.bf16 %v522, %v521
        %v555 = vld [vmem:[%s364] sm:$0xff]
        %v556 = vld [vmem:[%s364 + $0x8] sm:$0xff]
        %v557 = vld [vmem:[%s364 + $0x10] sm:$0xff]
        %v558 = vld [vmem:[%s364 + $0x18] sm:$0xff]
        %v559 = vld [vmem:[%s364 + $0x20] sm:$0xff]
        %v560 = vld [vmem:[%s364 + $0x28] sm:$0xff]
        %v561 = vld [vmem:[%s364 + $0x30] sm:$0xff]
        %v562 = vld [vmem:[%s364 + $0x38] sm:$0xff]
        %v563 = vld [vmem:[%s364 + $0x40] sm:$0xff]
        %v564 = vld [vmem:[%s364 + $0x48] sm:$0xff]
        %v565 = vld [vmem:[%s364 + $0x50] sm:$0xff]
        %v566 = vld [vmem:[%s364 + $0x58] sm:$0xff]
        %v567 = vld [vmem:[%s364 + $0x60] sm:$0xff]
        %v568 = vld [vmem:[%s364 + $0x68] sm:$0xff]
        %v569 = vld [vmem:[%s364 + $0x70] sm:$0xff]
        %v570 = vld [vmem:[%s364 + $0x78] sm:$0xff]
        %v571 = vld [vmem:[%s364 + $0x80] sm:$0xff]
        %v572 = vld [vmem:[%s364 + $0x88] sm:$0xff]
        %v573 = vld [vmem:[%s364 + $0x90] sm:$0xff]
        %v574 = vld [vmem:[%s364 + $0x98] sm:$0xff]
        %v575 = vld [vmem:[%s364 + $0xa0] sm:$0xff]
        %v576 = vld [vmem:[%s364 + $0xa8] sm:$0xff]
        %v577 = vld [vmem:[%s364 + $0xb0] sm:$0xff]
        %v578 = vld [vmem:[%s364 + $0xb8] sm:$0xff]
        %v579 = vld [vmem:[%s364 + $0xc0] sm:$0xff]
        %v580 = vld [vmem:[%s364 + $0xc8] sm:$0xff]
        %v581 = vld [vmem:[%s364 + $0xd0] sm:$0xff]
        %v582 = vld [vmem:[%s364 + $0xd8] sm:$0xff]
        %v583 = vld [vmem:[%s364 + $0xe0] sm:$0xff]
        %v584 = vld [vmem:[%s364 + $0xe8] sm:$0xff]
        %v585 = vld [vmem:[%s364 + $0xf0] sm:$0xff]
        %v586 = vld [vmem:[%s364 + $0xf8] sm:$0xff]
        %v587 = vld [vmem:[%s364 + $0x100] sm:$0xff]
        %v588 = vld [vmem:[%s364 + $0x108] sm:$0xff]
        %v589 = vld [vmem:[%s364 + $0x110] sm:$0xff]
        %v590 = vld [vmem:[%s364 + $0x118] sm:$0xff]
        %v591 = vld [vmem:[%s364 + $0x120] sm:$0xff]
        %v592 = vld [vmem:[%s364 + $0x128] sm:$0xff]
        %v593 = vld [vmem:[%s364 + $0x130] sm:$0xff]
        %v594 = vld [vmem:[%s364 + $0x138] sm:$0xff]
        %v595 = vld [vmem:[%s364 + $0x140] sm:$0xff]
        %v596 = vld [vmem:[%s364 + $0x148] sm:$0xff]
        %v597 = vld [vmem:[%s364 + $0x150] sm:$0xff]
        %v598 = vld [vmem:[%s364 + $0x158] sm:$0xff]
        %v599 = vld [vmem:[%s364 + $0x160] sm:$0xff]
        %v600 = vld [vmem:[%s364 + $0x168] sm:$0xff]
        %v601 = vld [vmem:[%s364 + $0x170] sm:$0xff]
        %v602 = vld [vmem:[%s364 + $0x178] sm:$0xff]
        %v603 = vld [vmem:[%s364 + $0x180] sm:$0xff]
        %v604 = vld [vmem:[%s364 + $0x188] sm:$0xff]
        %v605 = vld [vmem:[%s364 + $0x190] sm:$0xff]
        %v606 = vld [vmem:[%s364 + $0x198] sm:$0xff]
        %v607 = vld [vmem:[%s364 + $0x1a0] sm:$0xff]
        %v608 = vld [vmem:[%s364 + $0x1a8] sm:$0xff]
        %v609 = vld [vmem:[%s364 + $0x1b0] sm:$0xff]
        %v610 = vld [vmem:[%s364 + $0x1b8] sm:$0xff]
        %v611 = vld [vmem:[%s364 + $0x1c0] sm:$0xff]
        %v612 = vld [vmem:[%s364 + $0x1c8] sm:$0xff]
        %v613 = vld [vmem:[%s364 + $0x1d0] sm:$0xff]
        %v614 = vld [vmem:[%s364 + $0x1d8] sm:$0xff]
        %v615 = vld [vmem:[%s364 + $0x1e0] sm:$0xff]
        %v616 = vld [vmem:[%s364 + $0x1e8] sm:$0xff]
        %v617 = vld [vmem:[%s364 + $0x1f0] sm:$0xff]
        %v618 = vld [vmem:[%s364 + $0x1f8] sm:$0xff]
        %v619 = vpack.c.bf16 %v556, %v555
        %v620 = vpack.c.bf16 %v558, %v557
        %v621 = vpack.c.bf16 %v560, %v559
        %v622 = vpack.c.bf16 %v562, %v561
        %v623 = vpack.c.bf16 %v564, %v563
        %v624 = vpack.c.bf16 %v566, %v565
        %v625 = vpack.c.bf16 %v568, %v567
        %v626 = vpack.c.bf16 %v570, %v569
        %v627 = vpack.c.bf16 %v572, %v571
        %v628 = vpack.c.bf16 %v574, %v573
        %v629 = vpack.c.bf16 %v576, %v575
        %v630 = vpack.c.bf16 %v578, %v577
        %v631 = vpack.c.bf16 %v580, %v579
        %v632 = vpack.c.bf16 %v582, %v581
        %v633 = vpack.c.bf16 %v584, %v583
        %v634 = vpack.c.bf16 %v586, %v585
        %v635 = vpack.c.bf16 %v588, %v587
        %v636 = vpack.c.bf16 %v590, %v589
        %v637 = vpack.c.bf16 %v592, %v591
        %v638 = vpack.c.bf16 %v594, %v593
        %v639 = vpack.c.bf16 %v596, %v595
        %v640 = vpack.c.bf16 %v598, %v597
        %v641 = vpack.c.bf16 %v600, %v599
        %v642 = vpack.c.bf16 %v602, %v601
        %v643 = vpack.c.bf16 %v604, %v603
        %v644 = vpack.c.bf16 %v606, %v605
        %v645 = vpack.c.bf16 %v608, %v607
        %v646 = vpack.c.bf16 %v610, %v609
        %v647 = vpack.c.bf16 %v612, %v611
        %v648 = vpack.c.bf16 %v614, %v613
        %v649 = vpack.c.bf16 %v616, %v615
        %v650 = vpack.c.bf16 %v618, %v617
        %v651 = vld [vmem:[%s381] sm:$0xff]
        %v652 = vld [vmem:[%s381 + $0x8] sm:$0xff]
        %v653 = vld [vmem:[%s381 + $0x10] sm:$0xff]
        %v654 = vld [vmem:[%s381 + $0x18] sm:$0xff]
        %v655 = vld [vmem:[%s381 + $0x20] sm:$0xff]
        %v656 = vld [vmem:[%s381 + $0x28] sm:$0xff]
        %v657 = vld [vmem:[%s381 + $0x30] sm:$0xff]
        %v658 = vld [vmem:[%s381 + $0x38] sm:$0xff]
        %v659 = vld [vmem:[%s381 + $0x40] sm:$0xff]
        %v660 = vld [vmem:[%s381 + $0x48] sm:$0xff]
        %v661 = vld [vmem:[%s381 + $0x50] sm:$0xff]
        %v662 = vld [vmem:[%s381 + $0x58] sm:$0xff]
        %v663 = vld [vmem:[%s381 + $0x60] sm:$0xff]
        %v664 = vld [vmem:[%s381 + $0x68] sm:$0xff]
        %v665 = vld [vmem:[%s381 + $0x70] sm:$0xff]
        %v666 = vld [vmem:[%s381 + $0x78] sm:$0xff]
        %vm667 = vcmask 130048
        %v669 = vsel %vm667, %v523, 0
        %v672 = vsel %vm667, %v524, 0
        %v675 = vsel %vm667, %v525, 0
        %v678 = vsel %vm667, %v526, 0
        %v681 = vsel %vm667, %v527, 0
        %v684 = vsel %vm667, %v528, 0
        %v687 = vsel %vm667, %v529, 0
        %v690 = vsel %vm667, %v530, 0
        %v693 = vsel %vm667, %v619, 0
        %v696 = vsel %vm667, %v620, 0
        %v699 = vsel %vm667, %v621, 0
        %v702 = vsel %vm667, %v622, 0
        %v705 = vsel %vm667, %v623, 0
        %v708 = vsel %vm667, %v624, 0
        %v711 = vsel %vm667, %v625, 0
        %v714 = vsel %vm667, %v626, 0
        %716 = vmatprep.subr.bf16.mxu0 0
        %717 = vmatpush1.bf16.xpose.msra.mxu0 %v693
        %718 = vmatprep.subr.bf16.mxu0 0
        %719 = vmatpush1.bf16.xpose.msra.mxu0 %v696
        %720 = vmatprep.subr.bf16.mxu0 0
        %721 = vmatpush1.bf16.xpose.msra.mxu0 %v699
        %722 = vmatprep.subr.bf16.mxu0 0
        %723 = vmatpush1.bf16.xpose.msra.mxu0 %v702
        %724 = vmatprep.subr.bf16.mxu0 0
        %725 = vmatpush1.bf16.xpose.msra.mxu0 %v705
        %726 = vmatprep.subr.bf16.mxu0 0
        %727 = vmatpush1.bf16.xpose.msra.mxu0 %v708
        %728 = vmatprep.subr.bf16.mxu0 0
        %729 = vmatpush1.bf16.xpose.msra.mxu0 %v711
        %730 = vmatprep.subr.bf16.mxu0 0
        %731 = vmatpush1.bf16.xpose.msra.mxu0 %v714
        %732 = vmatprep.subr.bf16.mxu0 0
        %733 = vmatpush1.bf16.xpose.msra.mxu0 0
        %734 = vmatprep.subr.bf16.mxu0 0
        %735 = vmatpush1.bf16.xpose.msra.mxu0 0
        %736 = vmatprep.subr.bf16.mxu0 0
        %737 = vmatpush1.bf16.xpose.msra.mxu0 0
        %738 = vmatprep.subr.bf16.mxu0 0
        %739 = vmatpush1.bf16.xpose.msra.mxu0 0
        %740 = vmatprep.subr.bf16.mxu0 0
        %741 = vmatpush1.bf16.xpose.msra.mxu0 0
        %742 = vmatprep.subr.bf16.mxu0 0
        %743 = vmatpush1.bf16.xpose.msra.mxu0 0
        %744 = vmatprep.subr.bf16.mxu0 0
        %745 = vmatpush1.bf16.xpose.msra.mxu0 0
        %746 = vmatprep.subr.bf16.mxu0 0
        %747 = vmatpush1.bf16.xpose.msra.mxu0 0
        %748 = vmatprep.mubr.bf16.mxu0 0
        %749 = vmatmul.mubr.bf16.gmra.mrb[0].mxu0 %v669
        %v750 = vpop.f32.mrb[0].mxu0
        %v751 = vadd.f32 %v651, %v750
        %v752 = vpop.f32.mrb[0].mxu0
        %v753 = vpop.f32.mrb[0].mxu0
        %v754 = vadd.f32 %v652, %v753
        %v755 = vpop.f32.mrb[0].mxu0
        %756 = vmatprep.mubr.bf16.mxu0 0
        %757 = vmatmul.mubr.bf16.gmra.mrb[0].mxu0 %v672
        %v758 = vpop.f32.mrb[0].mxu0
        %v759 = vadd.f32 %v653, %v758
        %v760 = vpop.f32.mrb[0].mxu0
        %v761 = vpop.f32.mrb[0].mxu0
        %v762 = vadd.f32 %v654, %v761
        %v763 = vpop.f32.mrb[0].mxu0
        %764 = vmatprep.mubr.bf16.mxu0 0
        %765 = vmatmul.mubr.bf16.gmra.mrb[0].mxu0 %v675
        %v766 = vpop.f32.mrb[0].mxu0
        %v767 = vadd.f32 %v655, %v766
        %v768 = vpop.f32.mrb[0].mxu0
        %v769 = vpop.f32.mrb[0].mxu0
        %v770 = vadd.f32 %v656, %v769
        %v771 = vpop.f32.mrb[0].mxu0
        %772 = vmatprep.mubr.bf16.mxu0 0
        %773 = vmatmul.mubr.bf16.gmra.mrb[0].mxu0 %v678
        %v774 = vpop.f32.mrb[0].mxu0
        %v775 = vadd.f32 %v657, %v774
        %v776 = vpop.f32.mrb[0].mxu0
        %v777 = vpop.f32.mrb[0].mxu0
        %v778 = vadd.f32 %v658, %v777
        %v779 = vpop.f32.mrb[0].mxu0
        %780 = vmatprep.mubr.bf16.mxu0 0
        %781 = vmatmul.mubr.bf16.gmra.mrb[0].mxu0 %v681
        %v782 = vpop.f32.mrb[0].mxu0
        %v783 = vadd.f32 %v659, %v782
        %v784 = vpop.f32.mrb[0].mxu0
        %v785 = vpop.f32.mrb[0].mxu0
        %v786 = vadd.f32 %v660, %v785
        %v787 = vpop.f32.mrb[0].mxu0
        %788 = vmatprep.mubr.bf16.mxu0 0
        %789 = vmatmul.mubr.bf16.gmra.mrb[0].mxu0 %v684
        %v790 = vpop.f32.mrb[0].mxu0
        %v791 = vadd.f32 %v661, %v790
        %v792 = vpop.f32.mrb[0].mxu0
        %v793 = vpop.f32.mrb[0].mxu0
        %v794 = vadd.f32 %v662, %v793
        %v795 = vpop.f32.mrb[0].mxu0
        %796 = vmatprep.mubr.bf16.mxu0 0
        %797 = vmatmul.mubr.bf16.gmra.mrb[0].mxu0 %v687
        %v798 = vpop.f32.mrb[0].mxu0
        %v799 = vadd.f32 %v663, %v798
        %v800 = vpop.f32.mrb[0].mxu0
        %v801 = vpop.f32.mrb[0].mxu0
        %v802 = vadd.f32 %v664, %v801
        %v803 = vpop.f32.mrb[0].mxu0
        %804 = vmatprep.mubr.bf16.mxu0 0
        %805 = vmatmul.mubr.bf16.gmra.mrb[0].mxu0 %v690
        %v806 = vpop.f32.mrb[0].mxu0
        %v807 = vadd.f32 %v665, %v806
        %v808 = vpop.f32.mrb[0].mxu0
        %v809 = vpop.f32.mrb[0].mxu0
        %v810 = vadd.f32 %v666, %v809
        %v811 = vpop.f32.mrb[0].mxu0
        %812 = vdwg.mxu0
        %v814 = vsel %vm667, %v531, 0
        %v817 = vsel %vm667, %v532, 0
        %v820 = vsel %vm667, %v533, 0
        %v823 = vsel %vm667, %v534, 0
        %v826 = vsel %vm667, %v535, 0
        %v829 = vsel %vm667, %v536, 0
        %v832 = vsel %vm667, %v537, 0
        %v835 = vsel %vm667, %v538, 0
        %v838 = vsel %vm667, %v627, 0
        %v841 = vsel %vm667, %v628, 0
        %v844 = vsel %vm667, %v629, 0
        %v847 = vsel %vm667, %v630, 0
        %v850 = vsel %vm667, %v631, 0
        %v853 = vsel %vm667, %v632, 0
        %v856 = vsel %vm667, %v633, 0
        %v859 = vsel %vm667, %v634, 0
        %861 = vmatprep.subr.bf16.mxu0 0
        %862 = vmatpush1.bf16.xpose.msra.mxu0 %v838
        %863 = vmatprep.subr.bf16.mxu0 0
        %864 = vmatpush1.bf16.xpose.msra.mxu0 %v841
        %865 = vmatprep.subr.bf16.mxu0 0
        %866 = vmatpush1.bf16.xpose.msra.mxu0 %v844
        %867 = vmatprep.subr.bf16.mxu0 0
        %868 = vmatpush1.bf16.xpose.msra.mxu0 %v847
        %869 = vmatprep.subr.bf16.mxu0 0
        %870 = vmatpush1.bf16.xpose.msra.mxu0 %v850
        %871 = vmatprep.subr.bf16.mxu0 0
        %872 = vmatpush1.bf16.xpose.msra.mxu0 %v853
        %873 = vmatprep.subr.bf16.mxu0 0
        %874 = vmatpush1.bf16.xpose.msra.mxu0 %v856
        %875 = vmatprep.subr.bf16.mxu0 0
        %876 = vmatpush1.bf16.xpose.msra.mxu0 %v859
        %877 = vmatprep.subr.bf16.mxu0 0
        %878 = vmatpush1.bf16.xpose.msra.mxu0 0
        %879 = vmatprep.subr.bf16.mxu0 0
        %880 = vmatpush1.bf16.xpose.msra.mxu0 0
        %881 = vmatprep.subr.bf16.mxu0 0
        %882 = vmatpush1.bf16.xpose.msra.mxu0 0
        %883 = vmatprep.subr.bf16.mxu0 0
        %884 = vmatpush1.bf16.xpose.msra.mxu0 0
        %885 = vmatprep.subr.bf16.mxu0 0
        %886 = vmatpush1.bf16.xpose.msra.mxu0 0
        %887 = vmatprep.subr.bf16.mxu0 0
        %888 = vmatpush1.bf16.xpose.msra.mxu0 0
        %889 = vmatprep.subr.bf16.mxu0 0
        %890 = vmatpush1.bf16.xpose.msra.mxu0 0
        %891 = vmatprep.subr.bf16.mxu0 0
        %892 = vmatpush1.bf16.xpose.msra.mxu0 0
        %893 = vmatprep.mubr.bf16.mxu0 0
        %894 = vmatmul.mubr.bf16.gmra.mrb[0].mxu0 %v814
        %v895 = vpop.f32.mrb[0].mxu0
        %v896 = vadd.f32 %v651, %v895
        %v897 = vpop.f32.mrb[0].mxu0
        %v898 = vpop.f32.mrb[0].mxu0
        %v899 = vadd.f32 %v652, %v898
        %v900 = vpop.f32.mrb[0].mxu0
        %901 = vmatprep.mubr.bf16.mxu0 0
        %902 = vmatmul.mubr.bf16.gmra.mrb[0].mxu0 %v817
        %v903 = vpop.f32.mrb[0].mxu0
        %v904 = vadd.f32 %v653, %v903
        %v905 = vpop.f32.mrb[0].mxu0
        %v906 = vpop.f32.mrb[0].mxu0
        %v907 = vadd.f32 %v654, %v906
        %v908 = vpop.f32.mrb[0].mxu0
        %909 = vmatprep.mubr.bf16.mxu0 0
        %910 = vmatmul.mubr.bf16.gmra.mrb[0].mxu0 %v820
        %v911 = vpop.f32.mrb[0].mxu0
        %v912 = vadd.f32 %v655, %v911
        %v913 = vpop.f32.mrb[0].mxu0
        %v914 = vpop.f32.mrb[0].mxu0
        %v915 = vadd.f32 %v656, %v914
        %v916 = vpop.f32.mrb[0].mxu0
        %917 = vmatprep.mubr.bf16.mxu0 0
        %918 = vmatmul.mubr.bf16.gmra.mrb[0].mxu0 %v823
        %v919 = vpop.f32.mrb[0].mxu0
        %v920 = vadd.f32 %v657, %v919
        %v921 = vpop.f32.mrb[0].mxu0
        %v922 = vpop.f32.mrb[0].mxu0
        %v923 = vadd.f32 %v658, %v922
        %v924 = vpop.f32.mrb[0].mxu0
        %925 = vmatprep.mubr.bf16.mxu0 0
        %926 = vmatmul.mubr.bf16.gmra.mrb[0].mxu0 %v826
        %v927 = vpop.f32.mrb[0].mxu0
        %v928 = vadd.f32 %v659, %v927
        %v929 = vpop.f32.mrb[0].mxu0
        %v930 = vpop.f32.mrb[0].mxu0
        %v931 = vadd.f32 %v660, %v930
        %v932 = vpop.f32.mrb[0].mxu0
        %933 = vmatprep.mubr.bf16.mxu0 0
        %934 = vmatmul.mubr.bf16.gmra.mrb[0].mxu0 %v829
        %v935 = vpop.f32.mrb[0].mxu0
        %v936 = vadd.f32 %v661, %v935
        %v937 = vpop.f32.mrb[0].mxu0
        %v938 = vpop.f32.mrb[0].mxu0
        %v939 = vadd.f32 %v662, %v938
        %v940 = vpop.f32.mrb[0].mxu0
        %941 = vmatprep.mubr.bf16.mxu0 0
        %942 = vmatmul.mubr.bf16.gmra.mrb[0].mxu0 %v832
        %v943 = vpop.f32.mrb[0].mxu0
        %v944 = vadd.f32 %v663, %v943
        %v945 = vpop.f32.mrb[0].mxu0
        %v946 = vpop.f32.mrb[0].mxu0
        %v947 = vadd.f32 %v664, %v946
        %v948 = vpop.f32.mrb[0].mxu0
        %949 = vmatprep.mubr.bf16.mxu0 0
        %950 = vmatmul.mubr.bf16.gmra.mrb[0].mxu0 %v835
        %v951 = vpop.f32.mrb[0].mxu0
        %v952 = vadd.f32 %v665, %v951
        %v953 = vpop.f32.mrb[0].mxu0
        %v954 = vpop.f32.mrb[0].mxu0
        %v955 = vadd.f32 %v666, %v954
        %v956 = vpop.f32.mrb[0].mxu0
        %957 = vdwg.mxu0
        %v959 = vsel %vm667, %v539, 0
        %v962 = vsel %vm667, %v540, 0
        %v965 = vsel %vm667, %v541, 0
        %v968 = vsel %vm667, %v542, 0
        %v971 = vsel %vm667, %v543, 0
        %v974 = vsel %vm667, %v544, 0
        %v977 = vsel %vm667, %v545, 0
        %v980 = vsel %vm667, %v546, 0
        %v983 = vsel %vm667, %v635, 0
        %v986 = vsel %vm667, %v636, 0
        %v989 = vsel %vm667, %v637, 0
        %v992 = vsel %vm667, %v638, 0
        %v995 = vsel %vm667, %v639, 0
        %v998 = vsel %vm667, %v640, 0
        %v1001 = vsel %vm667, %v641, 0
        %v1004 = vsel %vm667, %v642, 0
        %1006 = vmatprep.subr.bf16.mxu0 0
        %1007 = vmatpush1.bf16.xpose.msra.mxu0 %v983
        %1008 = vmatprep.subr.bf16.mxu0 0
        %1009 = vmatpush1.bf16.xpose.msra.mxu0 %v986
        %1010 = vmatprep.subr.bf16.mxu0 0
        %1011 = vmatpush1.bf16.xpose.msra.mxu0 %v989
        %1012 = vmatprep.subr.bf16.mxu0 0
        %1013 = vmatpush1.bf16.xpose.msra.mxu0 %v992
        %1014 = vmatprep.subr.bf16.mxu0 0
        %1015 = vmatpush1.bf16.xpose.msra.mxu0 %v995
        %1016 = vmatprep.subr.bf16.mxu0 0
        %1017 = vmatpush1.bf16.xpose.msra.mxu0 %v998
        %1018 = vmatprep.subr.bf16.mxu0 0
        %1019 = vmatpush1.bf16.xpose.msra.mxu0 %v1001
        %1020 = vmatprep.subr.bf16.mxu0 0
        %1021 = vmatpush1.bf16.xpose.msra.mxu0 %v1004
        %1022 = vmatprep.subr.bf16.mxu0 0
        %1023 = vmatpush1.bf16.xpose.msra.mxu0 0
        %1024 = vmatprep.subr.bf16.mxu0 0
        %1025 = vmatpush1.bf16.xpose.msra.mxu0 0
        %1026 = vmatprep.subr.bf16.mxu0 0
        %1027 = vmatpush1.bf16.xpose.msra.mxu0 0
        %1028 = vmatprep.subr.bf16.mxu0 0
        %1029 = vmatpush1.bf16.xpose.msra.mxu0 0
        %1030 = vmatprep.subr.bf16.mxu0 0
        %1031 = vmatpush1.bf16.xpose.msra.mxu0 0
        %1032 = vmatprep.subr.bf16.mxu0 0
        %1033 = vmatpush1.bf16.xpose.msra.mxu0 0
        %1034 = vmatprep.subr.bf16.mxu0 0
        %1035 = vmatpush1.bf16.xpose.msra.mxu0 0
        %1036 = vmatprep.subr.bf16.mxu0 0
        %1037 = vmatpush1.bf16.xpose.msra.mxu0 0
        %1038 = vmatprep.mubr.bf16.mxu0 0
        %1039 = vmatmul.mubr.bf16.gmra.mrb[0].mxu0 %v959
        %v1040 = vpop.f32.mrb[0].mxu0
        %v1041 = vadd.f32 %v651, %v1040
        %v1042 = vpop.f32.mrb[0].mxu0
        %v1043 = vpop.f32.mrb[0].mxu0
        %v1044 = vadd.f32 %v652, %v1043
        %v1045 = vpop.f32.mrb[0].mxu0
        %1046 = vmatprep.mubr.bf16.mxu0 0
        %1047 = vmatmul.mubr.bf16.gmra.mrb[0].mxu0 %v962
        %v1048 = vpop.f32.mrb[0].mxu0
        %v1049 = vadd.f32 %v653, %v1048
        %v1050 = vpop.f32.mrb[0].mxu0
        %v1051 = vpop.f32.mrb[0].mxu0
        %v1052 = vadd.f32 %v654, %v1051
        %v1053 = vpop.f32.mrb[0].mxu0
        %1054 = vmatprep.mubr.bf16.mxu0 0
        %1055 = vmatmul.mubr.bf16.gmra.mrb[0].mxu0 %v965
        %v1056 = vpop.f32.mrb[0].mxu0
        %v1057 = vadd.f32 %v655, %v1056
        %v1058 = vpop.f32.mrb[0].mxu0
        %v1059 = vpop.f32.mrb[0].mxu0
        %v1060 = vadd.f32 %v656, %v1059
        %v1061 = vpop.f32.mrb[0].mxu0
        %1062 = vmatprep.mubr.bf16.mxu0 0
        %1063 = vmatmul.mubr.bf16.gmra.mrb[0].mxu0 %v968
        %v1064 = vpop.f32.mrb[0].mxu0
        %v1065 = vadd.f32 %v657, %v1064
        %v1066 = vpop.f32.mrb[0].mxu0
        %v1067 = vpop.f32.mrb[0].mxu0
        %v1068 = vadd.f32 %v658, %v1067
        %v1069 = vpop.f32.mrb[0].mxu0
        %1070 = vmatprep.mubr.bf16.mxu0 0
        %1071 = vmatmul.mubr.bf16.gmra.mrb[0].mxu0 %v971
        %v1072 = vpop.f32.mrb[0].mxu0
        %v1073 = vadd.f32 %v659, %v1072
        %v1074 = vpop.f32.mrb[0].mxu0
        %v1075 = vpop.f32.mrb[0].mxu0
        %v1076 = vadd.f32 %v660, %v1075
        %v1077 = vpop.f32.mrb[0].mxu0
        %1078 = vmatprep.mubr.bf16.mxu0 0
        %1079 = vmatmul.mubr.bf16.gmra.mrb[0].mxu0 %v974
        %v1080 = vpop.f32.mrb[0].mxu0
        %v1081 = vadd.f32 %v661, %v1080
        %v1082 = vpop.f32.mrb[0].mxu0
        %v1083 = vpop.f32.mrb[0].mxu0
        %v1084 = vadd.f32 %v662, %v1083
        %v1085 = vpop.f32.mrb[0].mxu0
        %1086 = vmatprep.mubr.bf16.mxu0 0
        %1087 = vmatmul.mubr.bf16.gmra.mrb[0].mxu0 %v977
        %v1088 = vpop.f32.mrb[0].mxu0
        %v1089 = vadd.f32 %v663, %v1088
        %v1090 = vpop.f32.mrb[0].mxu0
        %v1091 = vpop.f32.mrb[0].mxu0
        %v1092 = vadd.f32 %v664, %v1091
        %v1093 = vpop.f32.mrb[0].mxu0
        %1094 = vmatprep.mubr.bf16.mxu0 0
        %1095 = vmatmul.mubr.bf16.gmra.mrb[0].mxu0 %v980
        %v1096 = vpop.f32.mrb[0].mxu0
        %v1097 = vadd.f32 %v665, %v1096
        %v1098 = vpop.f32.mrb[0].mxu0
        %v1099 = vpop.f32.mrb[0].mxu0
        %v1100 = vadd.f32 %v666, %v1099
        %v1101 = vpop.f32.mrb[0].mxu0
        %1102 = vdwg.mxu0
        %v1104 = vsel %vm667, %v547, 0
        %v1107 = vsel %vm667, %v548, 0
        %v1110 = vsel %vm667, %v549, 0
        %v1113 = vsel %vm667, %v550, 0
        %v1116 = vsel %vm667, %v551, 0
        %v1119 = vsel %vm667, %v552, 0
        %v1122 = vsel %vm667, %v553, 0
        %v1125 = vsel %vm667, %v554, 0
        %v1128 = vsel %vm667, %v643, 0
        %v1131 = vsel %vm667, %v644, 0
        %v1134 = vsel %vm667, %v645, 0
        %v1137 = vsel %vm667, %v646, 0
        %v1140 = vsel %vm667, %v647, 0
        %v1143 = vsel %vm667, %v648, 0
        %v1146 = vsel %vm667, %v649, 0
        %v1149 = vsel %vm667, %v650, 0
        %1151 = vmatprep.subr.bf16.mxu0 0
        %1152 = vmatpush1.bf16.xpose.msra.mxu0 %v1128
        %1153 = vmatprep.subr.bf16.mxu0 0
        %1154 = vmatpush1.bf16.xpose.msra.mxu0 %v1131
        %1155 = vmatprep.subr.bf16.mxu0 0
        %1156 = vmatpush1.bf16.xpose.msra.mxu0 %v1134
        %1157 = vmatprep.subr.bf16.mxu0 0
        %1158 = vmatpush1.bf16.xpose.msra.mxu0 %v1137
        %1159 = vmatprep.subr.bf16.mxu0 0
        %1160 = vmatpush1.bf16.xpose.msra.mxu0 %v1140
        %1161 = vmatprep.subr.bf16.mxu0 0
        %1162 = vmatpush1.bf16.xpose.msra.mxu0 %v1143
        %1163 = vmatprep.subr.bf16.mxu0 0
        %1164 = vmatpush1.bf16.xpose.msra.mxu0 %v1146
        %1165 = vmatprep.subr.bf16.mxu0 0
        %1166 = vmatpush1.bf16.xpose.msra.mxu0 %v1149
        %1167 = vmatprep.subr.bf16.mxu0 0
        %1168 = vmatpush1.bf16.xpose.msra.mxu0 0
        %1169 = vmatprep.subr.bf16.mxu0 0
        %1170 = vmatpush1.bf16.xpose.msra.mxu0 0
        %1171 = vmatprep.subr.bf16.mxu0 0
        %1172 = vmatpush1.bf16.xpose.msra.mxu0 0
        %1173 = vmatprep.subr.bf16.mxu0 0
        %1174 = vmatpush1.bf16.xpose.msra.mxu0 0
        %1175 = vmatprep.subr.bf16.mxu0 0
        %1176 = vmatpush1.bf16.xpose.msra.mxu0 0
        %1177 = vmatprep.subr.bf16.mxu0 0
        %1178 = vmatpush1.bf16.xpose.msra.mxu0 0
        %1179 = vmatprep.subr.bf16.mxu0 0
        %1180 = vmatpush1.bf16.xpose.msra.mxu0 0
        %1181 = vmatprep.subr.bf16.mxu0 0
        %1182 = vmatpush1.bf16.xpose.msra.mxu0 0
        %1183 = vmatprep.mubr.bf16.mxu0 0
        %1184 = vmatmul.mubr.bf16.gmra.mrb[0].mxu0 %v1104
        %v1185 = vpop.f32.mrb[0].mxu0
        %v1186 = vadd.f32 %v651, %v1185
        %v1187 = vpop.f32.mrb[0].mxu0
        %v1188 = vpop.f32.mrb[0].mxu0
        %v1189 = vadd.f32 %v652, %v1188
        %v1190 = vpop.f32.mrb[0].mxu0
        %1191 = vmatprep.mubr.bf16.mxu0 0
        %1192 = vmatmul.mubr.bf16.gmra.mrb[0].mxu0 %v1107
        %v1193 = vpop.f32.mrb[0].mxu0
        %v1194 = vadd.f32 %v653, %v1193
        %v1195 = vpop.f32.mrb[0].mxu0
        %v1196 = vpop.f32.mrb[0].mxu0
        %v1197 = vadd.f32 %v654, %v1196
        %v1198 = vpop.f32.mrb[0].mxu0
        %1199 = vmatprep.mubr.bf16.mxu0 0
        %1200 = vmatmul.mubr.bf16.gmra.mrb[0].mxu0 %v1110
        %v1201 = vpop.f32.mrb[0].mxu0
        %v1202 = vadd.f32 %v655, %v1201
        %v1203 = vpop.f32.mrb[0].mxu0
        %v1204 = vpop.f32.mrb[0].mxu0
        %v1205 = vadd.f32 %v656, %v1204
        %v1206 = vpop.f32.mrb[0].mxu0
        %1207 = vmatprep.mubr.bf16.mxu0 0
        %1208 = vmatmul.mubr.bf16.gmra.mrb[0].mxu0 %v1113
        %v1209 = vpop.f32.mrb[0].mxu0
        %v1210 = vadd.f32 %v657, %v1209
        %v1211 = vpop.f32.mrb[0].mxu0
        %v1212 = vpop.f32.mrb[0].mxu0
        %v1213 = vadd.f32 %v658, %v1212
        %v1214 = vpop.f32.mrb[0].mxu0
        %1215 = vmatprep.mubr.bf16.mxu0 0
        %1216 = vmatmul.mubr.bf16.gmra.mrb[0].mxu0 %v1116
        %v1217 = vpop.f32.mrb[0].mxu0
        %v1218 = vadd.f32 %v659, %v1217
        %v1219 = vpop.f32.mrb[0].mxu0
        %v1220 = vpop.f32.mrb[0].mxu0
        %v1221 = vadd.f32 %v660, %v1220
        %v1222 = vpop.f32.mrb[0].mxu0
        %1223 = vmatprep.mubr.bf16.mxu0 0
        %1224 = vmatmul.mubr.bf16.gmra.mrb[0].mxu0 %v1119
        %v1225 = vpop.f32.mrb[0].mxu0
        %v1226 = vadd.f32 %v661, %v1225
        %v1227 = vpop.f32.mrb[0].mxu0
        %v1228 = vpop.f32.mrb[0].mxu0
        %v1229 = vadd.f32 %v662, %v1228
        %v1230 = vpop.f32.mrb[0].mxu0
        %1231 = vmatprep.mubr.bf16.mxu0 0
        %1232 = vmatmul.mubr.bf16.gmra.mrb[0].mxu0 %v1122
        %v1233 = vpop.f32.mrb[0].mxu0
        %v1234 = vadd.f32 %v663, %v1233
        %v1235 = vpop.f32.mrb[0].mxu0
        %v1236 = vpop.f32.mrb[0].mxu0
        %v1237 = vadd.f32 %v664, %v1236
        %v1238 = vpop.f32.mrb[0].mxu0
        %1239 = vmatprep.mubr.bf16.mxu0 0
        %1240 = vmatmul.mubr.bf16.gmra.mrb[0].mxu0 %v1125
        %v1241 = vpop.f32.mrb[0].mxu0
        %v1242 = vadd.f32 %v665, %v1241
        %v1243 = vpop.f32.mrb[0].mxu0
        %v1244 = vpop.f32.mrb[0].mxu0
        %v1245 = vadd.f32 %v666, %v1244
        %v1246 = vpop.f32.mrb[0].mxu0
        %1247 = vdwg.mxu0
        %1248 = vmax.xlane.f32.xlu0 %v751
        %v1249 = vpop.xlane.xlu0 %1248
        %1250 = vmax.xlane.f32.xlu0 %v754
        %v1251 = vpop.xlane.xlu0 %1250
        %1252 = vmax.xlane.f32.xlu0 %v759
        %v1253 = vpop.xlane.xlu0 %1252
        %1254 = vmax.xlane.f32.xlu0 %v762
        %v1255 = vpop.xlane.xlu0 %1254
        %1256 = vmax.xlane.f32.xlu0 %v767
        %v1257 = vpop.xlane.xlu0 %1256
        %1258 = vmax.xlane.f32.xlu0 %v770
        %v1259 = vpop.xlane.xlu0 %1258
        %1260 = vmax.xlane.f32.xlu0 %v775
        %v1261 = vpop.xlane.xlu0 %1260
        %1262 = vmax.xlane.f32.xlu0 %v778
        %v1263 = vpop.xlane.xlu0 %1262
        %1264 = vmax.xlane.f32.xlu0 %v783
        %v1265 = vpop.xlane.xlu0 %1264
        %1266 = vmax.xlane.f32.xlu0 %v786
        %v1267 = vpop.xlane.xlu0 %1266
        %1268 = vmax.xlane.f32.xlu0 %v791
        %v1269 = vpop.xlane.xlu0 %1268
        %1270 = vmax.xlane.f32.xlu0 %v794
        %v1271 = vpop.xlane.xlu0 %1270
        %1272 = vmax.xlane.f32.xlu0 %v799
        %v1273 = vpop.xlane.xlu0 %1272
        %1274 = vmax.xlane.f32.xlu0 %v802
        %v1275 = vpop.xlane.xlu0 %1274
        %1276 = vmax.xlane.f32.xlu0 %v807
        %v1277 = vpop.xlane.xlu0 %1276
        %1278 = vmax.xlane.f32.xlu0 %v810
        %v1279 = vpop.xlane.xlu0 %1278
        %1280 = vmax.xlane.f32.xlu0 %v896
        %v1281 = vpop.xlane.xlu0 %1280
        %1282 = vmax.xlane.f32.xlu0 %v899
        %v1283 = vpop.xlane.xlu0 %1282
        %1284 = vmax.xlane.f32.xlu0 %v904
        %v1285 = vpop.xlane.xlu0 %1284
        %1286 = vmax.xlane.f32.xlu0 %v907
        %v1287 = vpop.xlane.xlu0 %1286
        %1288 = vmax.xlane.f32.xlu0 %v912
        %v1289 = vpop.xlane.xlu0 %1288
        %1290 = vmax.xlane.f32.xlu0 %v915
        %v1291 = vpop.xlane.xlu0 %1290
        %1292 = vmax.xlane.f32.xlu0 %v920
        %v1293 = vpop.xlane.xlu0 %1292
        %1294 = vmax.xlane.f32.xlu0 %v923
        %v1295 = vpop.xlane.xlu0 %1294
        %1296 = vmax.xlane.f32.xlu0 %v928
        %v1297 = vpop.xlane.xlu0 %1296
        %1298 = vmax.xlane.f32.xlu0 %v931
        %v1299 = vpop.xlane.xlu0 %1298
        %1300 = vmax.xlane.f32.xlu0 %v936
        %v1301 = vpop.xlane.xlu0 %1300
        %1302 = vmax.xlane.f32.xlu0 %v939
        %v1303 = vpop.xlane.xlu0 %1302
        %1304 = vmax.xlane.f32.xlu0 %v944
        %v1305 = vpop.xlane.xlu0 %1304
        %1306 = vmax.xlane.f32.xlu0 %v947
        %v1307 = vpop.xlane.xlu0 %1306
        %1308 = vmax.xlane.f32.xlu0 %v952
        %v1309 = vpop.xlane.xlu0 %1308
        %1310 = vmax.xlane.f32.xlu0 %v955
        %v1311 = vpop.xlane.xlu0 %1310
        %1312 = vmax.xlane.f32.xlu0 %v1041
        %v1313 = vpop.xlane.xlu0 %1312
        %1314 = vmax.xlane.f32.xlu0 %v1044
        %v1315 = vpop.xlane.xlu0 %1314
        %1316 = vmax.xlane.f32.xlu0 %v1049
        %v1317 = vpop.xlane.xlu0 %1316
        %1318 = vmax.xlane.f32.xlu0 %v1052
        %v1319 = vpop.xlane.xlu0 %1318
        %1320 = vmax.xlane.f32.xlu0 %v1057
        %v1321 = vpop.xlane.xlu0 %1320
        %1322 = vmax.xlane.f32.xlu0 %v1060
        %v1323 = vpop.xlane.xlu0 %1322
        %1324 = vmax.xlane.f32.xlu0 %v1065
        %v1325 = vpop.xlane.xlu0 %1324
        %1326 = vmax.xlane.f32.xlu0 %v1068
        %v1327 = vpop.xlane.xlu0 %1326
        %1328 = vmax.xlane.f32.xlu0 %v1073
        %v1329 = vpop.xlane.xlu0 %1328
        %1330 = vmax.xlane.f32.xlu0 %v1076
        %v1331 = vpop.xlane.xlu0 %1330
        %1332 = vmax.xlane.f32.xlu0 %v1081
        %v1333 = vpop.xlane.xlu0 %1332
        %1334 = vmax.xlane.f32.xlu0 %v1084
        %v1335 = vpop.xlane.xlu0 %1334
        %1336 = vmax.xlane.f32.xlu0 %v1089
        %v1337 = vpop.xlane.xlu0 %1336
        %1338 = vmax.xlane.f32.xlu0 %v1092
        %v1339 = vpop.xlane.xlu0 %1338
        %1340 = vmax.xlane.f32.xlu0 %v1097
        %v1341 = vpop.xlane.xlu0 %1340
        %1342 = vmax.xlane.f32.xlu0 %v1100
        %v1343 = vpop.xlane.xlu0 %1342
        %1344 = vmax.xlane.f32.xlu0 %v1186
        %v1345 = vpop.xlane.xlu0 %1344
        %1346 = vmax.xlane.f32.xlu0 %v1189
        %v1347 = vpop.xlane.xlu0 %1346
        %1348 = vmax.xlane.f32.xlu0 %v1194
        %v1349 = vpop.xlane.xlu0 %1348
        %1350 = vmax.xlane.f32.xlu0 %v1197
        %v1351 = vpop.xlane.xlu0 %1350
        %1352 = vmax.xlane.f32.xlu0 %v1202
        %v1353 = vpop.xlane.xlu0 %1352
        %1354 = vmax.xlane.f32.xlu0 %v1205
        %v1355 = vpop.xlane.xlu0 %1354
        %1356 = vmax.xlane.f32.xlu0 %v1210
        %v1357 = vpop.xlane.xlu0 %1356
        %1358 = vmax.xlane.f32.xlu0 %v1213
        %v1359 = vpop.xlane.xlu0 %1358
        %1360 = vmax.xlane.f32.xlu0 %v1218
        %v1361 = vpop.xlane.xlu0 %1360
        %1362 = vmax.xlane.f32.xlu0 %v1221
        %v1363 = vpop.xlane.xlu0 %1362
        %1364 = vmax.xlane.f32.xlu0 %v1226
        %v1365 = vpop.xlane.xlu0 %1364
        %1366 = vmax.xlane.f32.xlu0 %v1229
        %v1367 = vpop.xlane.xlu0 %1366
        %1368 = vmax.xlane.f32.xlu0 %v1234
        %v1369 = vpop.xlane.xlu0 %1368
        %1370 = vmax.xlane.f32.xlu0 %v1237
        %v1371 = vpop.xlane.xlu0 %1370
        %1372 = vmax.xlane.f32.xlu0 %v1242
        %v1373 = vpop.xlane.xlu0 %1372
        %1374 = vmax.xlane.f32.xlu0 %v1245
        %v1375 = vpop.xlane.xlu0 %1374
        %v1376 = vsub.f32 %v751, %v1249
        %v1377 = vsub.f32 %v754, %v1251
        %v1378 = vsub.f32 %v759, %v1253
        %v1379 = vsub.f32 %v762, %v1255
        %v1380 = vsub.f32 %v767, %v1257
        %v1381 = vsub.f32 %v770, %v1259
        %v1382 = vsub.f32 %v775, %v1261
        %v1383 = vsub.f32 %v778, %v1263
        %v1384 = vsub.f32 %v783, %v1265
        %v1385 = vsub.f32 %v786, %v1267
        %v1386 = vsub.f32 %v791, %v1269
        %v1387 = vsub.f32 %v794, %v1271
        %v1388 = vsub.f32 %v799, %v1273
        %v1389 = vsub.f32 %v802, %v1275
        %v1390 = vsub.f32 %v807, %v1277
        %v1391 = vsub.f32 %v810, %v1279
        %v1392 = vsub.f32 %v896, %v1281
        %v1393 = vsub.f32 %v899, %v1283
        %v1394 = vsub.f32 %v904, %v1285
        %v1395 = vsub.f32 %v907, %v1287
        %v1396 = vsub.f32 %v912, %v1289
        %v1397 = vsub.f32 %v915, %v1291
        %v1398 = vsub.f32 %v920, %v1293
        %v1399 = vsub.f32 %v923, %v1295
        %v1400 = vsub.f32 %v928, %v1297
        %v1401 = vsub.f32 %v931, %v1299
        %v1402 = vsub.f32 %v936, %v1301
        %v1403 = vsub.f32 %v939, %v1303
        %v1404 = vsub.f32 %v944, %v1305
        %v1405 = vsub.f32 %v947, %v1307
        %v1406 = vsub.f32 %v952, %v1309
        %v1407 = vsub.f32 %v955, %v1311
        %v1408 = vsub.f32 %v1041, %v1313
        %v1409 = vsub.f32 %v1044, %v1315
        %v1410 = vsub.f32 %v1049, %v1317
        %v1411 = vsub.f32 %v1052, %v1319
        %v1412 = vsub.f32 %v1057, %v1321
        %v1413 = vsub.f32 %v1060, %v1323
        %v1414 = vsub.f32 %v1065, %v1325
        %v1415 = vsub.f32 %v1068, %v1327
        %v1416 = vsub.f32 %v1073, %v1329
        %v1417 = vsub.f32 %v1076, %v1331
        %v1418 = vsub.f32 %v1081, %v1333
        %v1419 = vsub.f32 %v1084, %v1335
        %v1420 = vsub.f32 %v1089, %v1337
        %v1421 = vsub.f32 %v1092, %v1339
        %v1422 = vsub.f32 %v1097, %v1341
        %v1423 = vsub.f32 %v1100, %v1343
        %v1424 = vsub.f32 %v1186, %v1345
        %v1425 = vsub.f32 %v1189, %v1347
        %v1426 = vsub.f32 %v1194, %v1349
        %v1427 = vsub.f32 %v1197, %v1351
        %v1428 = vsub.f32 %v1202, %v1353
        %v1429 = vsub.f32 %v1205, %v1355
        %v1430 = vsub.f32 %v1210, %v1357
        %v1431 = vsub.f32 %v1213, %v1359
        %v1432 = vsub.f32 %v1218, %v1361
        %v1433 = vsub.f32 %v1221, %v1363
        %v1434 = vsub.f32 %v1226, %v1365
        %v1435 = vsub.f32 %v1229, %v1367
        %v1436 = vsub.f32 %v1234, %v1369
        %v1437 = vsub.f32 %v1237, %v1371
        %v1438 = vsub.f32 %v1242, %v1373
        %v1439 = vsub.f32 %v1245, %v1375
        %v1440 = vmul.f32 %v1376, 1.442695
        %v1441 = vpow.pop %v1440
        %v1442 = vmul.f32 %v1377, 1.442695
        %v1443 = vpow.pop %v1442
        %v1444 = vmul.f32 %v1378, 1.442695
        %v1445 = vpow.pop %v1444
        %v1446 = vmul.f32 %v1379, 1.442695
        %v1447 = vpow.pop %v1446
        %v1448 = vmul.f32 %v1380, 1.442695
        %v1449 = vpow.pop %v1448
        %v1450 = vmul.f32 %v1381, 1.442695
        %v1451 = vpow.pop %v1450
        %v1452 = vmul.f32 %v1382, 1.442695
        %v1453 = vpow.pop %v1452
        %v1454 = vmul.f32 %v1383, 1.442695
        %v1455 = vpow.pop %v1454
        %v1456 = vmul.f32 %v1384, 1.442695
        %v1457 = vpow.pop %v1456
        %v1458 = vmul.f32 %v1385, 1.442695
        %v1459 = vpow.pop %v1458
        %v1460 = vmul.f32 %v1386, 1.442695
        %v1461 = vpow.pop %v1460
        %v1462 = vmul.f32 %v1387, 1.442695
        %v1463 = vpow.pop %v1462
        %v1464 = vmul.f32 %v1388, 1.442695
        %v1465 = vpow.pop %v1464
        %v1466 = vmul.f32 %v1389, 1.442695
        %v1467 = vpow.pop %v1466
        %v1468 = vmul.f32 %v1390, 1.442695
        %v1469 = vpow.pop %v1468
        %v1470 = vmul.f32 %v1391, 1.442695
        %v1471 = vpow.pop %v1470
        %v1472 = vmul.f32 %v1392, 1.442695
        %v1473 = vpow.pop %v1472
        %v1474 = vmul.f32 %v1393, 1.442695
        %v1475 = vpow.pop %v1474
        %v1476 = vmul.f32 %v1394, 1.442695
        %v1477 = vpow.pop %v1476
        %v1478 = vmul.f32 %v1395, 1.442695
        %v1479 = vpow.pop %v1478
        %v1480 = vmul.f32 %v1396, 1.442695
        %v1481 = vpow.pop %v1480
        %v1482 = vmul.f32 %v1397, 1.442695
        %v1483 = vpow.pop %v1482
        %v1484 = vmul.f32 %v1398, 1.442695
        %v1485 = vpow.pop %v1484
        %v1486 = vmul.f32 %v1399, 1.442695
        %v1487 = vpow.pop %v1486
        %v1488 = vmul.f32 %v1400, 1.442695
        %v1489 = vpow.pop %v1488
        %v1490 = vmul.f32 %v1401, 1.442695
        %v1491 = vpow.pop %v1490
        %v1492 = vmul.f32 %v1402, 1.442695
        %v1493 = vpow.pop %v1492
        %v1494 = vmul.f32 %v1403, 1.442695
        %v1495 = vpow.pop %v1494
        %v1496 = vmul.f32 %v1404, 1.442695
        %v1497 = vpow.pop %v1496
        %v1498 = vmul.f32 %v1405, 1.442695
        %v1499 = vpow.pop %v1498
        %v1500 = vmul.f32 %v1406, 1.442695
        %v1501 = vpow.pop %v1500
        %v1502 = vmul.f32 %v1407, 1.442695
        %v1503 = vpow.pop %v1502
        %v1504 = vmul.f32 %v1408, 1.442695
        %v1505 = vpow.pop %v1504
        %v1506 = vmul.f32 %v1409, 1.442695
        %v1507 = vpow.pop %v1506
        %v1508 = vmul.f32 %v1410, 1.442695
        %v1509 = vpow.pop %v1508
        %v1510 = vmul.f32 %v1411, 1.442695
        %v1511 = vpow.pop %v1510
        %v1512 = vmul.f32 %v1412, 1.442695
        %v1513 = vpow.pop %v1512
        %v1514 = vmul.f32 %v1413, 1.442695
        %v1515 = vpow.pop %v1514
        %v1516 = vmul.f32 %v1414, 1.442695
        %v1517 = vpow.pop %v1516
        %v1518 = vmul.f32 %v1415, 1.442695
        %v1519 = vpow.pop %v1518
        %v1520 = vmul.f32 %v1416, 1.442695
        %v1521 = vpow.pop %v1520
        %v1522 = vmul.f32 %v1417, 1.442695
        %v1523 = vpow.pop %v1522
        %v1524 = vmul.f32 %v1418, 1.442695
        %v1525 = vpow.pop %v1524
        %v1526 = vmul.f32 %v1419, 1.442695
        %v1527 = vpow.pop %v1526
        %v1528 = vmul.f32 %v1420, 1.442695
        %v1529 = vpow.pop %v1528
        %v1530 = vmul.f32 %v1421, 1.442695
        %v1531 = vpow.pop %v1530
        %v1532 = vmul.f32 %v1422, 1.442695
        %v1533 = vpow.pop %v1532
        %v1534 = vmul.f32 %v1423, 1.442695
        %v1535 = vpow.pop %v1534
        %v1536 = vmul.f32 %v1424, 1.442695
        %v1537 = vpow.pop %v1536
        %v1538 = vmul.f32 %v1425, 1.442695
        %v1539 = vpow.pop %v1538
        %v1540 = vmul.f32 %v1426, 1.442695
        %v1541 = vpow.pop %v1540
        %v1542 = vmul.f32 %v1427, 1.442695
        %v1543 = vpow.pop %v1542
        %v1544 = vmul.f32 %v1428, 1.442695
        %v1545 = vpow.pop %v1544
        %v1546 = vmul.f32 %v1429, 1.442695
        %v1547 = vpow.pop %v1546
        %v1548 = vmul.f32 %v1430, 1.442695
        %v1549 = vpow.pop %v1548
        %v1550 = vmul.f32 %v1431, 1.442695
        %v1551 = vpow.pop %v1550
        %v1552 = vmul.f32 %v1432, 1.442695
        %v1553 = vpow.pop %v1552
        %v1554 = vmul.f32 %v1433, 1.442695
        %v1555 = vpow.pop %v1554
        %v1556 = vmul.f32 %v1434, 1.442695
        %v1557 = vpow.pop %v1556
        %v1558 = vmul.f32 %v1435, 1.442695
        %v1559 = vpow.pop %v1558
        %v1560 = vmul.f32 %v1436, 1.442695
        %v1561 = vpow.pop %v1560
        %v1562 = vmul.f32 %v1437, 1.442695
        %v1563 = vpow.pop %v1562
        %v1564 = vmul.f32 %v1438, 1.442695
        %v1565 = vpow.pop %v1564
        %v1566 = vmul.f32 %v1439, 1.442695
        %v1567 = vpow.pop %v1566
        %1568 = vadd.xlane.f32.xlu0 %v1441
        %v1569 = vpop.xlane.xlu0 %1568
        %1570 = vadd.xlane.f32.xlu0 %v1443
        %v1571 = vpop.xlane.xlu0 %1570
        %1572 = vadd.xlane.f32.xlu0 %v1445
        %v1573 = vpop.xlane.xlu0 %1572
        %1574 = vadd.xlane.f32.xlu0 %v1447
        %v1575 = vpop.xlane.xlu0 %1574
        %1576 = vadd.xlane.f32.xlu0 %v1449
        %v1577 = vpop.xlane.xlu0 %1576
        %1578 = vadd.xlane.f32.xlu0 %v1451
        %v1579 = vpop.xlane.xlu0 %1578
        %1580 = vadd.xlane.f32.xlu0 %v1453
        %v1581 = vpop.xlane.xlu0 %1580
        %1582 = vadd.xlane.f32.xlu0 %v1455
        %v1583 = vpop.xlane.xlu0 %1582
        %1584 = vadd.xlane.f32.xlu0 %v1457
        %v1585 = vpop.xlane.xlu0 %1584
        %1586 = vadd.xlane.f32.xlu0 %v1459
        %v1587 = vpop.xlane.xlu0 %1586
        %1588 = vadd.xlane.f32.xlu0 %v1461
        %v1589 = vpop.xlane.xlu0 %1588
        %1590 = vadd.xlane.f32.xlu0 %v1463
        %v1591 = vpop.xlane.xlu0 %1590
        %1592 = vadd.xlane.f32.xlu0 %v1465
        %v1593 = vpop.xlane.xlu0 %1592
        %1594 = vadd.xlane.f32.xlu0 %v1467
        %v1595 = vpop.xlane.xlu0 %1594
        %1596 = vadd.xlane.f32.xlu0 %v1469
        %v1597 = vpop.xlane.xlu0 %1596
        %1598 = vadd.xlane.f32.xlu0 %v1471
        %v1599 = vpop.xlane.xlu0 %1598
        %1600 = vadd.xlane.f32.xlu0 %v1473
        %v1601 = vpop.xlane.xlu0 %1600
        %1602 = vadd.xlane.f32.xlu0 %v1475
        %v1603 = vpop.xlane.xlu0 %1602
        %1604 = vadd.xlane.f32.xlu0 %v1477
        %v1605 = vpop.xlane.xlu0 %1604
        %1606 = vadd.xlane.f32.xlu0 %v1479
        %v1607 = vpop.xlane.xlu0 %1606
        %1608 = vadd.xlane.f32.xlu0 %v1481
        %v1609 = vpop.xlane.xlu0 %1608
        %1610 = vadd.xlane.f32.xlu0 %v1483
        %v1611 = vpop.xlane.xlu0 %1610
        %1612 = vadd.xlane.f32.xlu0 %v1485
        %v1613 = vpop.xlane.xlu0 %1612
        %1614 = vadd.xlane.f32.xlu0 %v1487
        %v1615 = vpop.xlane.xlu0 %1614
        %1616 = vadd.xlane.f32.xlu0 %v1489
        %v1617 = vpop.xlane.xlu0 %1616
        %1618 = vadd.xlane.f32.xlu0 %v1491
        %v1619 = vpop.xlane.xlu0 %1618
        %1620 = vadd.xlane.f32.xlu0 %v1493
        %v1621 = vpop.xlane.xlu0 %1620
        %1622 = vadd.xlane.f32.xlu0 %v1495
        %v1623 = vpop.xlane.xlu0 %1622
        %1624 = vadd.xlane.f32.xlu0 %v1497
        %v1625 = vpop.xlane.xlu0 %1624
        %1626 = vadd.xlane.f32.xlu0 %v1499
        %v1627 = vpop.xlane.xlu0 %1626
        %1628 = vadd.xlane.f32.xlu0 %v1501
        %v1629 = vpop.xlane.xlu0 %1628
        %1630 = vadd.xlane.f32.xlu0 %v1503
        %v1631 = vpop.xlane.xlu0 %1630
        %1632 = vadd.xlane.f32.xlu0 %v1505
        %v1633 = vpop.xlane.xlu0 %1632
        %1634 = vadd.xlane.f32.xlu0 %v1507
        %v1635 = vpop.xlane.xlu0 %1634
        %1636 = vadd.xlane.f32.xlu0 %v1509
        %v1637 = vpop.xlane.xlu0 %1636
        %1638 = vadd.xlane.f32.xlu0 %v1511
        %v1639 = vpop.xlane.xlu0 %1638
        %1640 = vadd.xlane.f32.xlu0 %v1513
        %v1641 = vpop.xlane.xlu0 %1640
        %1642 = vadd.xlane.f32.xlu0 %v1515
        %v1643 = vpop.xlane.xlu0 %1642
        %1644 = vadd.xlane.f32.xlu0 %v1517
        %v1645 = vpop.xlane.xlu0 %1644
        %1646 = vadd.xlane.f32.xlu0 %v1519
        %v1647 = vpop.xlane.xlu0 %1646
        %1648 = vadd.xlane.f32.xlu0 %v1521
        %v1649 = vpop.xlane.xlu0 %1648
        %1650 = vadd.xlane.f32.xlu0 %v1523
        %v1651 = vpop.xlane.xlu0 %1650
        %1652 = vadd.xlane.f32.xlu0 %v1525
        %v1653 = vpop.xlane.xlu0 %1652
        %1654 = vadd.xlane.f32.xlu0 %v1527
        %v1655 = vpop.xlane.xlu0 %1654
        %1656 = vadd.xlane.f32.xlu0 %v1529
        %v1657 = vpop.xlane.xlu0 %1656
        %1658 = vadd.xlane.f32.xlu0 %v1531
        %v1659 = vpop.xlane.xlu0 %1658
        %1660 = vadd.xlane.f32.xlu0 %v1533
        %v1661 = vpop.xlane.xlu0 %1660
        %1662 = vadd.xlane.f32.xlu0 %v1535
        %v1663 = vpop.xlane.xlu0 %1662
        %1664 = vadd.xlane.f32.xlu0 %v1537
        %v1665 = vpop.xlane.xlu0 %1664
        %1666 = vadd.xlane.f32.xlu0 %v1539
        %v1667 = vpop.xlane.xlu0 %1666
        %1668 = vadd.xlane.f32.xlu0 %v1541
        %v1669 = vpop.xlane.xlu0 %1668
        %1670 = vadd.xlane.f32.xlu0 %v1543
        %v1671 = vpop.xlane.xlu0 %1670
        %1672 = vadd.xlane.f32.xlu0 %v1545
        %v1673 = vpop.xlane.xlu0 %1672
        %1674 = vadd.xlane.f32.xlu0 %v1547
        %v1675 = vpop.xlane.xlu0 %1674
        %1676 = vadd.xlane.f32.xlu0 %v1549
        %v1677 = vpop.xlane.xlu0 %1676
        %1678 = vadd.xlane.f32.xlu0 %v1551
        %v1679 = vpop.xlane.xlu0 %1678
        %1680 = vadd.xlane.f32.xlu0 %v1553
        %v1681 = vpop.xlane.xlu0 %1680
        %1682 = vadd.xlane.f32.xlu0 %v1555
        %v1683 = vpop.xlane.xlu0 %1682
        %1684 = vadd.xlane.f32.xlu0 %v1557
        %v1685 = vpop.xlane.xlu0 %1684
        %1686 = vadd.xlane.f32.xlu0 %v1559
        %v1687 = vpop.xlane.xlu0 %1686
        %1688 = vadd.xlane.f32.xlu0 %v1561
        %v1689 = vpop.xlane.xlu0 %1688
        %1690 = vadd.xlane.f32.xlu0 %v1563
        %v1691 = vpop.xlane.xlu0 %1690
        %1692 = vadd.xlane.f32.xlu0 %v1565
        %v1693 = vpop.xlane.xlu0 %1692
        %1694 = vadd.xlane.f32.xlu0 %v1567
        %v1695 = vpop.xlane.xlu0 %1694
        %v1696 = vmul.f32 %v1569, 0.997
        %v1697 = vmul.f32 %v1571, 0.997
        %v1698 = vmul.f32 %v1573, 0.997
        %v1699 = vmul.f32 %v1575, 0.997
        %v1700 = vmul.f32 %v1577, 0.997
        %v1701 = vmul.f32 %v1579, 0.997
        %v1702 = vmul.f32 %v1581, 0.997
        %v1703 = vmul.f32 %v1583, 0.997
        %v1704 = vmul.f32 %v1585, 0.997
        %v1705 = vmul.f32 %v1587, 0.997
        %v1706 = vmul.f32 %v1589, 0.997
        %v1707 = vmul.f32 %v1591, 0.997
        %v1708 = vmul.f32 %v1593, 0.997
        %v1709 = vmul.f32 %v1595, 0.997
        %v1710 = vmul.f32 %v1597, 0.997
        %v1711 = vmul.f32 %v1599, 0.997
        %v1712 = vmul.f32 %v1601, 0.997
        %v1713 = vmul.f32 %v1603, 0.997
        %v1714 = vmul.f32 %v1605, 0.997
        %v1715 = vmul.f32 %v1607, 0.997
        %v1716 = vmul.f32 %v1609, 0.997
        %v1717 = vmul.f32 %v1611, 0.997
        %v1718 = vmul.f32 %v1613, 0.997
        %v1719 = vmul.f32 %v1615, 0.997
        %v1720 = vmul.f32 %v1617, 0.997
        %v1721 = vmul.f32 %v1619, 0.997
        %v1722 = vmul.f32 %v1621, 0.997
        %v1723 = vmul.f32 %v1623, 0.997
        %v1724 = vmul.f32 %v1625, 0.997
        %v1725 = vmul.f32 %v1627, 0.997
        %v1726 = vmul.f32 %v1629, 0.997
        %v1727 = vmul.f32 %v1631, 0.997
        %v1728 = vmul.f32 %v1633, 0.997
        %v1729 = vmul.f32 %v1635, 0.997
        %v1730 = vmul.f32 %v1637, 0.997
        %v1731 = vmul.f32 %v1639, 0.997
        %v1732 = vmul.f32 %v1641, 0.997
        %v1733 = vmul.f32 %v1643, 0.997
        %v1734 = vmul.f32 %v1645, 0.997
        %v1735 = vmul.f32 %v1647, 0.997
        %v1736 = vmul.f32 %v1649, 0.997
        %v1737 = vmul.f32 %v1651, 0.997
        %v1738 = vmul.f32 %v1653, 0.997
        %v1739 = vmul.f32 %v1655, 0.997
        %v1740 = vmul.f32 %v1657, 0.997
        %v1741 = vmul.f32 %v1659, 0.997
        %v1742 = vmul.f32 %v1661, 0.997
        %v1743 = vmul.f32 %v1663, 0.997
        %v1744 = vmul.f32 %v1665, 0.997
        %v1745 = vmul.f32 %v1667, 0.997
        %v1746 = vmul.f32 %v1669, 0.997
        %v1747 = vmul.f32 %v1671, 0.997
        %v1748 = vmul.f32 %v1673, 0.997
        %v1749 = vmul.f32 %v1675, 0.997
        %v1750 = vmul.f32 %v1677, 0.997
        %v1751 = vmul.f32 %v1679, 0.997
        %v1752 = vmul.f32 %v1681, 0.997
        %v1753 = vmul.f32 %v1683, 0.997
        %v1754 = vmul.f32 %v1685, 0.997
        %v1755 = vmul.f32 %v1687, 0.997
        %v1756 = vmul.f32 %v1689, 0.997
        %v1757 = vmul.f32 %v1691, 0.997
        %v1758 = vmul.f32 %v1693, 0.997
        %v1759 = vmul.f32 %v1695, 0.997
        %v1760 = vrcp.pop %v1696
        %v1761 = vrcp.pop %v1697
        %v1762 = vrcp.pop %v1698
        %v1763 = vrcp.pop %v1699
        %v1764 = vrcp.pop %v1700
        %v1765 = vrcp.pop %v1701
        %v1766 = vrcp.pop %v1702
        %v1767 = vrcp.pop %v1703
        %v1768 = vrcp.pop %v1704
        %v1769 = vrcp.pop %v1705
        %v1770 = vrcp.pop %v1706
        %v1771 = vrcp.pop %v1707
        %v1772 = vrcp.pop %v1708
        %v1773 = vrcp.pop %v1709
        %v1774 = vrcp.pop %v1710
        %v1775 = vrcp.pop %v1711
        %v1776 = vrcp.pop %v1712
        %v1777 = vrcp.pop %v1713
        %v1778 = vrcp.pop %v1714
        %v1779 = vrcp.pop %v1715
        %v1780 = vrcp.pop %v1716
        %v1781 = vrcp.pop %v1717
        %v1782 = vrcp.pop %v1718
        %v1783 = vrcp.pop %v1719
        %v1784 = vrcp.pop %v1720
        %v1785 = vrcp.pop %v1721
        %v1786 = vrcp.pop %v1722
        %v1787 = vrcp.pop %v1723
        %v1788 = vrcp.pop %v1724
        %v1789 = vrcp.pop %v1725
        %v1790 = vrcp.pop %v1726
        %v1791 = vrcp.pop %v1727
        %v1792 = vrcp.pop %v1728
        %v1793 = vrcp.pop %v1729
        %v1794 = vrcp.pop %v1730
        %v1795 = vrcp.pop %v1731
        %v1796 = vrcp.pop %v1732
        %v1797 = vrcp.pop %v1733
        %v1798 = vrcp.pop %v1734
        %v1799 = vrcp.pop %v1735
        %v1800 = vrcp.pop %v1736
        %v1801 = vrcp.pop %v1737
        %v1802 = vrcp.pop %v1738
        %v1803 = vrcp.pop %v1739
        %v1804 = vrcp.pop %v1740
        %v1805 = vrcp.pop %v1741
        %v1806 = vrcp.pop %v1742
        %v1807 = vrcp.pop %v1743
        %v1808 = vrcp.pop %v1744
        %v1809 = vrcp.pop %v1745
        %v1810 = vrcp.pop %v1746
        %v1811 = vrcp.pop %v1747
        %v1812 = vrcp.pop %v1748
        %v1813 = vrcp.pop %v1749
        %v1814 = vrcp.pop %v1750
        %v1815 = vrcp.pop %v1751
        %v1816 = vrcp.pop %v1752
        %v1817 = vrcp.pop %v1753
        %v1818 = vrcp.pop %v1754
        %v1819 = vrcp.pop %v1755
        %v1820 = vrcp.pop %v1756
        %v1821 = vrcp.pop %v1757
        %v1822 = vrcp.pop %v1758
        %v1823 = vrcp.pop %v1759
        %v1824 = vld [vmem:[%s391] sm:$0xff]
        %v1825 = vld [vmem:[%s391 + $0x8] sm:$0xff]
        %v1826 = vld [vmem:[%s391 + $0x10] sm:$0xff]
        %v1827 = vld [vmem:[%s391 + $0x18] sm:$0xff]
        %v1828 = vld [vmem:[%s391 + $0x20] sm:$0xff]
        %v1829 = vld [vmem:[%s391 + $0x28] sm:$0xff]
        %v1830 = vld [vmem:[%s391 + $0x30] sm:$0xff]
        %v1831 = vld [vmem:[%s391 + $0x38] sm:$0xff]
        %v1832 = vld [vmem:[%s391 + $0x40] sm:$0xff]
        %v1833 = vld [vmem:[%s391 + $0x48] sm:$0xff]
        %v1834 = vld [vmem:[%s391 + $0x50] sm:$0xff]
        %v1835 = vld [vmem:[%s391 + $0x58] sm:$0xff]
        %v1836 = vld [vmem:[%s391 + $0x60] sm:$0xff]
        %v1837 = vld [vmem:[%s391 + $0x68] sm:$0xff]
        %v1838 = vld [vmem:[%s391 + $0x70] sm:$0xff]
        %v1839 = vld [vmem:[%s391 + $0x78] sm:$0xff]
        %v1840 = vld [vmem:[%s391 + $0x80] sm:$0xff]
        %v1841 = vld [vmem:[%s391 + $0x88] sm:$0xff]
        %v1842 = vld [vmem:[%s391 + $0x90] sm:$0xff]
        %v1843 = vld [vmem:[%s391 + $0x98] sm:$0xff]
        %v1844 = vld [vmem:[%s391 + $0xa0] sm:$0xff]
        %v1845 = vld [vmem:[%s391 + $0xa8] sm:$0xff]
        %v1846 = vld [vmem:[%s391 + $0xb0] sm:$0xff]
        %v1847 = vld [vmem:[%s391 + $0xb8] sm:$0xff]
        %v1848 = vld [vmem:[%s391 + $0xc0] sm:$0xff]
        %v1849 = vld [vmem:[%s391 + $0xc8] sm:$0xff]
        %v1850 = vld [vmem:[%s391 + $0xd0] sm:$0xff]
        %v1851 = vld [vmem:[%s391 + $0xd8] sm:$0xff]
        %v1852 = vld [vmem:[%s391 + $0xe0] sm:$0xff]
        %v1853 = vld [vmem:[%s391 + $0xe8] sm:$0xff]
        %v1854 = vld [vmem:[%s391 + $0xf0] sm:$0xff]
        %v1855 = vld [vmem:[%s391 + $0xf8] sm:$0xff]
        %v1856 = vld [vmem:[%s391 + $0x100] sm:$0xff]
        %v1857 = vld [vmem:[%s391 + $0x108] sm:$0xff]
        %v1858 = vld [vmem:[%s391 + $0x110] sm:$0xff]
        %v1859 = vld [vmem:[%s391 + $0x118] sm:$0xff]
        %v1860 = vld [vmem:[%s391 + $0x120] sm:$0xff]
        %v1861 = vld [vmem:[%s391 + $0x128] sm:$0xff]
        %v1862 = vld [vmem:[%s391 + $0x130] sm:$0xff]
        %v1863 = vld [vmem:[%s391 + $0x138] sm:$0xff]
        %v1864 = vld [vmem:[%s391 + $0x140] sm:$0xff]
        %v1865 = vld [vmem:[%s391 + $0x148] sm:$0xff]
        %v1866 = vld [vmem:[%s391 + $0x150] sm:$0xff]
        %v1867 = vld [vmem:[%s391 + $0x158] sm:$0xff]
        %v1868 = vld [vmem:[%s391 + $0x160] sm:$0xff]
        %v1869 = vld [vmem:[%s391 + $0x168] sm:$0xff]
        %v1870 = vld [vmem:[%s391 + $0x170] sm:$0xff]
        %v1871 = vld [vmem:[%s391 + $0x178] sm:$0xff]
        %v1872 = vld [vmem:[%s391 + $0x180] sm:$0xff]
        %v1873 = vld [vmem:[%s391 + $0x188] sm:$0xff]
        %v1874 = vld [vmem:[%s391 + $0x190] sm:$0xff]
        %v1875 = vld [vmem:[%s391 + $0x198] sm:$0xff]
        %v1876 = vld [vmem:[%s391 + $0x1a0] sm:$0xff]
        %v1877 = vld [vmem:[%s391 + $0x1a8] sm:$0xff]
        %v1878 = vld [vmem:[%s391 + $0x1b0] sm:$0xff]
        %v1879 = vld [vmem:[%s391 + $0x1b8] sm:$0xff]
        %v1880 = vld [vmem:[%s391 + $0x1c0] sm:$0xff]
        %v1881 = vld [vmem:[%s391 + $0x1c8] sm:$0xff]
        %v1882 = vld [vmem:[%s391 + $0x1d0] sm:$0xff]
        %v1883 = vld [vmem:[%s391 + $0x1d8] sm:$0xff]
        %v1884 = vld [vmem:[%s391 + $0x1e0] sm:$0xff]
        %v1885 = vld [vmem:[%s391 + $0x1e8] sm:$0xff]
        %v1886 = vld [vmem:[%s391 + $0x1f0] sm:$0xff]
        %v1887 = vld [vmem:[%s391 + $0x1f8] sm:$0xff]
        %vm1888 = vcmp.ge.f32.partialorder %v1824, 0.003
        %vm1889 = vcmp.ge.f32.partialorder %v1825, 0.003
        %vm1890 = vcmp.ge.f32.partialorder %v1826, 0.003
        %vm1891 = vcmp.ge.f32.partialorder %v1827, 0.003
        %vm1892 = vcmp.ge.f32.partialorder %v1828, 0.003
        %vm1893 = vcmp.ge.f32.partialorder %v1829, 0.003
        %vm1894 = vcmp.ge.f32.partialorder %v1830, 0.003
        %vm1895 = vcmp.ge.f32.partialorder %v1831, 0.003
        %vm1896 = vcmp.ge.f32.partialorder %v1832, 0.003
        %vm1897 = vcmp.ge.f32.partialorder %v1833, 0.003
        %vm1898 = vcmp.ge.f32.partialorder %v1834, 0.003
        %vm1899 = vcmp.ge.f32.partialorder %v1835, 0.003
        %vm1900 = vcmp.ge.f32.partialorder %v1836, 0.003
        %vm1901 = vcmp.ge.f32.partialorder %v1837, 0.003
        %vm1902 = vcmp.ge.f32.partialorder %v1838, 0.003
        %vm1903 = vcmp.ge.f32.partialorder %v1839, 0.003
        %vm1904 = vcmp.ge.f32.partialorder %v1840, 0.003
        %vm1905 = vcmp.ge.f32.partialorder %v1841, 0.003
        %vm1906 = vcmp.ge.f32.partialorder %v1842, 0.003
        %vm1907 = vcmp.ge.f32.partialorder %v1843, 0.003
        %vm1908 = vcmp.ge.f32.partialorder %v1844, 0.003
        %vm1909 = vcmp.ge.f32.partialorder %v1845, 0.003
        %vm1910 = vcmp.ge.f32.partialorder %v1846, 0.003
        %vm1911 = vcmp.ge.f32.partialorder %v1847, 0.003
        %vm1912 = vcmp.ge.f32.partialorder %v1848, 0.003
        %vm1913 = vcmp.ge.f32.partialorder %v1849, 0.003
        %vm1914 = vcmp.ge.f32.partialorder %v1850, 0.003
        %vm1915 = vcmp.ge.f32.partialorder %v1851, 0.003
        %vm1916 = vcmp.ge.f32.partialorder %v1852, 0.003
        %vm1917 = vcmp.ge.f32.partialorder %v1853, 0.003
        %vm1918 = vcmp.ge.f32.partialorder %v1854, 0.003
        %vm1919 = vcmp.ge.f32.partialorder %v1855, 0.003
        %vm1920 = vcmp.ge.f32.partialorder %v1856, 0.003
        %vm1921 = vcmp.ge.f32.partialorder %v1857, 0.003
        %vm1922 = vcmp.ge.f32.partialorder %v1858, 0.003
        %vm1923 = vcmp.ge.f32.partialorder %v1859, 0.003
        %vm1924 = vcmp.ge.f32.partialorder %v1860, 0.003
        %vm1925 = vcmp.ge.f32.partialorder %v1861, 0.003
        %vm1926 = vcmp.ge.f32.partialorder %v1862, 0.003
        %vm1927 = vcmp.ge.f32.partialorder %v1863, 0.003
        %vm1928 = vcmp.ge.f32.partialorder %v1864, 0.003
        %vm1929 = vcmp.ge.f32.partialorder %v1865, 0.003
        %vm1930 = vcmp.ge.f32.partialorder %v1866, 0.003
        %vm1931 = vcmp.ge.f32.partialorder %v1867, 0.003
        %vm1932 = vcmp.ge.f32.partialorder %v1868, 0.003
        %vm1933 = vcmp.ge.f32.partialorder %v1869, 0.003
        %vm1934 = vcmp.ge.f32.partialorder %v1870, 0.003
        %vm1935 = vcmp.ge.f32.partialorder %v1871, 0.003
        %vm1936 = vcmp.ge.f32.partialorder %v1872, 0.003
        %vm1937 = vcmp.ge.f32.partialorder %v1873, 0.003
        %vm1938 = vcmp.ge.f32.partialorder %v1874, 0.003
        %vm1939 = vcmp.ge.f32.partialorder %v1875, 0.003
        %vm1940 = vcmp.ge.f32.partialorder %v1876, 0.003
        %vm1941 = vcmp.ge.f32.partialorder %v1877, 0.003
        %vm1942 = vcmp.ge.f32.partialorder %v1878, 0.003
        %vm1943 = vcmp.ge.f32.partialorder %v1879, 0.003
        %vm1944 = vcmp.ge.f32.partialorder %v1880, 0.003
        %vm1945 = vcmp.ge.f32.partialorder %v1881, 0.003
        %vm1946 = vcmp.ge.f32.partialorder %v1882, 0.003
        %vm1947 = vcmp.ge.f32.partialorder %v1883, 0.003
        %vm1948 = vcmp.ge.f32.partialorder %v1884, 0.003
        %vm1949 = vcmp.ge.f32.partialorder %v1885, 0.003
        %vm1950 = vcmp.ge.f32.partialorder %v1886, 0.003
        %vm1951 = vcmp.ge.f32.partialorder %v1887, 0.003
        %v1952 = vmul.f32 %v1441, %v1760
        %v1953 = vmul.f32 %v1443, %v1761
        %v1954 = vmul.f32 %v1445, %v1762
        %v1955 = vmul.f32 %v1447, %v1763
        %v1956 = vmul.f32 %v1449, %v1764
        %v1957 = vmul.f32 %v1451, %v1765
        %v1958 = vmul.f32 %v1453, %v1766
        %v1959 = vmul.f32 %v1455, %v1767
        %v1960 = vmul.f32 %v1457, %v1768
        %v1961 = vmul.f32 %v1459, %v1769
        %v1962 = vmul.f32 %v1461, %v1770
        %v1963 = vmul.f32 %v1463, %v1771
        %v1964 = vmul.f32 %v1465, %v1772
        %v1965 = vmul.f32 %v1467, %v1773
        %v1966 = vmul.f32 %v1469, %v1774
        %v1967 = vmul.f32 %v1471, %v1775
        %v1968 = vmul.f32 %v1473, %v1776
        %v1969 = vmul.f32 %v1475, %v1777
        %v1970 = vmul.f32 %v1477, %v1778
        %v1971 = vmul.f32 %v1479, %v1779
        %v1972 = vmul.f32 %v1481, %v1780
        %v1973 = vmul.f32 %v1483, %v1781
        %v1974 = vmul.f32 %v1485, %v1782
        %v1975 = vmul.f32 %v1487, %v1783
        %v1976 = vmul.f32 %v1489, %v1784
        %v1977 = vmul.f32 %v1491, %v1785
        %v1978 = vmul.f32 %v1493, %v1786
        %v1979 = vmul.f32 %v1495, %v1787
        %v1980 = vmul.f32 %v1497, %v1788
        %v1981 = vmul.f32 %v1499, %v1789
        %v1982 = vmul.f32 %v1501, %v1790
        %v1983 = vmul.f32 %v1503, %v1791
        %v1984 = vmul.f32 %v1505, %v1792
        %v1985 = vmul.f32 %v1507, %v1793
        %v1986 = vmul.f32 %v1509, %v1794
        %v1987 = vmul.f32 %v1511, %v1795
        %v1988 = vmul.f32 %v1513, %v1796
        %v1989 = vmul.f32 %v1515, %v1797
        %v1990 = vmul.f32 %v1517, %v1798
        %v1991 = vmul.f32 %v1519, %v1799
        %v1992 = vmul.f32 %v1521, %v1800
        %v1993 = vmul.f32 %v1523, %v1801
        %v1994 = vmul.f32 %v1525, %v1802
        %v1995 = vmul.f32 %v1527, %v1803
        %v1996 = vmul.f32 %v1529, %v1804
        %v1997 = vmul.f32 %v1531, %v1805
        %v1998 = vmul.f32 %v1533, %v1806
        %v1999 = vmul.f32 %v1535, %v1807
        %v2000 = vmul.f32 %v1537, %v1808
        %v2001 = vmul.f32 %v1539, %v1809
        %v2002 = vmul.f32 %v1541, %v1810
        %v2003 = vmul.f32 %v1543, %v1811
        %v2004 = vmul.f32 %v1545, %v1812
        %v2005 = vmul.f32 %v1547, %v1813
        %v2006 = vmul.f32 %v1549, %v1814
        %v2007 = vmul.f32 %v1551, %v1815
        %v2008 = vmul.f32 %v1553, %v1816
        %v2009 = vmul.f32 %v1555, %v1817
        %v2010 = vmul.f32 %v1557, %v1818
        %v2011 = vmul.f32 %v1559, %v1819
        %v2012 = vmul.f32 %v1561, %v1820
        %v2013 = vmul.f32 %v1563, %v1821
        %v2014 = vmul.f32 %v1565, %v1822
        %v2015 = vmul.f32 %v1567, %v1823
        %v2016 = vsel %vm1888, %v1952, 0.0
        %v2017 = vsel %vm1889, %v1953, 0.0
        %v2018 = vsel %vm1890, %v1954, 0.0
        %v2019 = vsel %vm1891, %v1955, 0.0
        %v2020 = vsel %vm1892, %v1956, 0.0
        %v2021 = vsel %vm1893, %v1957, 0.0
        %v2022 = vsel %vm1894, %v1958, 0.0
        %v2023 = vsel %vm1895, %v1959, 0.0
        %v2024 = vsel %vm1896, %v1960, 0.0
        %v2025 = vsel %vm1897, %v1961, 0.0
        %v2026 = vsel %vm1898, %v1962, 0.0
        %v2027 = vsel %vm1899, %v1963, 0.0
        %v2028 = vsel %vm1900, %v1964, 0.0
        %v2029 = vsel %vm1901, %v1965, 0.0
        %v2030 = vsel %vm1902, %v1966, 0.0
        %v2031 = vsel %vm1903, %v1967, 0.0
        %v2032 = vsel %vm1904, %v1968, 0.0
        %v2033 = vsel %vm1905, %v1969, 0.0
        %v2034 = vsel %vm1906, %v1970, 0.0
        %v2035 = vsel %vm1907, %v1971, 0.0
        %v2036 = vsel %vm1908, %v1972, 0.0
        %v2037 = vsel %vm1909, %v1973, 0.0
        %v2038 = vsel %vm1910, %v1974, 0.0
        %v2039 = vsel %vm1911, %v1975, 0.0
        %v2040 = vsel %vm1912, %v1976, 0.0
        %v2041 = vsel %vm1913, %v1977, 0.0
        %v2042 = vsel %vm1914, %v1978, 0.0
        %v2043 = vsel %vm1915, %v1979, 0.0
        %v2044 = vsel %vm1916, %v1980, 0.0
        %v2045 = vsel %vm1917, %v1981, 0.0
        %v2046 = vsel %vm1918, %v1982, 0.0
        %v2047 = vsel %vm1919, %v1983, 0.0
        %v2048 = vsel %vm1920, %v1984, 0.0
        %v2049 = vsel %vm1921, %v1985, 0.0
        %v2050 = vsel %vm1922, %v1986, 0.0
        %v2051 = vsel %vm1923, %v1987, 0.0
        %v2052 = vsel %vm1924, %v1988, 0.0
        %v2053 = vsel %vm1925, %v1989, 0.0
        %v2054 = vsel %vm1926, %v1990, 0.0
        %v2055 = vsel %vm1927, %v1991, 0.0
        %v2056 = vsel %vm1928, %v1992, 0.0
        %v2057 = vsel %vm1929, %v1993, 0.0
        %v2058 = vsel %vm1930, %v1994, 0.0
        %v2059 = vsel %vm1931, %v1995, 0.0
        %v2060 = vsel %vm1932, %v1996, 0.0
        %v2061 = vsel %vm1933, %v1997, 0.0
        %v2062 = vsel %vm1934, %v1998, 0.0
        %v2063 = vsel %vm1935, %v1999, 0.0
        %v2064 = vsel %vm1936, %v2000, 0.0
        %v2065 = vsel %vm1937, %v2001, 0.0
        %v2066 = vsel %vm1938, %v2002, 0.0
        %v2067 = vsel %vm1939, %v2003, 0.0
        %v2068 = vsel %vm1940, %v2004, 0.0
        %v2069 = vsel %vm1941, %v2005, 0.0
        %v2070 = vsel %vm1942, %v2006, 0.0
        %v2071 = vsel %vm1943, %v2007, 0.0
        %v2072 = vsel %vm1944, %v2008, 0.0
        %v2073 = vsel %vm1945, %v2009, 0.0
        %v2074 = vsel %vm1946, %v2010, 0.0
        %v2075 = vsel %vm1947, %v2011, 0.0
        %v2076 = vsel %vm1948, %v2012, 0.0
        %v2077 = vsel %vm1949, %v2013, 0.0
        %v2078 = vsel %vm1950, %v2014, 0.0
        %v2079 = vsel %vm1951, %v2015, 0.0
        %v2080 = vpack.c.bf16 %v2017, %v2016
        %v2081 = vpack.c.bf16 %v2019, %v2018
        %v2082 = vpack.c.bf16 %v2021, %v2020
        %v2083 = vpack.c.bf16 %v2023, %v2022
        %v2084 = vpack.c.bf16 %v2025, %v2024
        %v2085 = vpack.c.bf16 %v2027, %v2026
        %v2086 = vpack.c.bf16 %v2029, %v2028
        %v2087 = vpack.c.bf16 %v2031, %v2030
        %v2088 = vpack.c.bf16 %v2033, %v2032
        %v2089 = vpack.c.bf16 %v2035, %v2034
        %v2090 = vpack.c.bf16 %v2037, %v2036
        %v2091 = vpack.c.bf16 %v2039, %v2038
        %v2092 = vpack.c.bf16 %v2041, %v2040
        %v2093 = vpack.c.bf16 %v2043, %v2042
        %v2094 = vpack.c.bf16 %v2045, %v2044
        %v2095 = vpack.c.bf16 %v2047, %v2046
        %v2096 = vpack.c.bf16 %v2049, %v2048
        %v2097 = vpack.c.bf16 %v2051, %v2050
        %v2098 = vpack.c.bf16 %v2053, %v2052
        %v2099 = vpack.c.bf16 %v2055, %v2054
        %v2100 = vpack.c.bf16 %v2057, %v2056
        %v2101 = vpack.c.bf16 %v2059, %v2058
        %v2102 = vpack.c.bf16 %v2061, %v2060
        %v2103 = vpack.c.bf16 %v2063, %v2062
        %v2104 = vpack.c.bf16 %v2065, %v2064
        %v2105 = vpack.c.bf16 %v2067, %v2066
        %v2106 = vpack.c.bf16 %v2069, %v2068
        %v2107 = vpack.c.bf16 %v2071, %v2070
        %v2108 = vpack.c.bf16 %v2073, %v2072
        %v2109 = vpack.c.bf16 %v2075, %v2074
        %v2110 = vpack.c.bf16 %v2077, %v2076
        %v2111 = vpack.c.bf16 %v2079, %v2078
        %v2112 = vld [vmem:[%s375] sm:$0xff]
        %v2113 = vld [vmem:[%s375 + $0x8] sm:$0xff]
        %v2114 = vld [vmem:[%s375 + $0x10] sm:$0xff]
        %v2115 = vld [vmem:[%s375 + $0x18] sm:$0xff]
        %v2116 = vld [vmem:[%s375 + $0x20] sm:$0xff]
        %v2117 = vld [vmem:[%s375 + $0x28] sm:$0xff]
        %v2118 = vld [vmem:[%s375 + $0x30] sm:$0xff]
        %v2119 = vld [vmem:[%s375 + $0x38] sm:$0xff]
        %v2120 = vld [vmem:[%s375 + $0x40] sm:$0xff]
        %v2121 = vld [vmem:[%s375 + $0x48] sm:$0xff]
        %v2122 = vld [vmem:[%s375 + $0x50] sm:$0xff]
        %v2123 = vld [vmem:[%s375 + $0x58] sm:$0xff]
        %v2124 = vld [vmem:[%s375 + $0x60] sm:$0xff]
        %v2125 = vld [vmem:[%s375 + $0x68] sm:$0xff]
        %v2126 = vld [vmem:[%s375 + $0x70] sm:$0xff]
        %v2127 = vld [vmem:[%s375 + $0x78] sm:$0xff]
        %v2128 = vld [vmem:[%s375 + $0x80] sm:$0xff]
        %v2129 = vld [vmem:[%s375 + $0x88] sm:$0xff]
        %v2130 = vld [vmem:[%s375 + $0x90] sm:$0xff]
        %v2131 = vld [vmem:[%s375 + $0x98] sm:$0xff]
        %v2132 = vld [vmem:[%s375 + $0xa0] sm:$0xff]
        %v2133 = vld [vmem:[%s375 + $0xa8] sm:$0xff]
        %v2134 = vld [vmem:[%s375 + $0xb0] sm:$0xff]
        %v2135 = vld [vmem:[%s375 + $0xb8] sm:$0xff]
        %v2136 = vld [vmem:[%s375 + $0xc0] sm:$0xff]
        %v2137 = vld [vmem:[%s375 + $0xc8] sm:$0xff]
        %v2138 = vld [vmem:[%s375 + $0xd0] sm:$0xff]
        %v2139 = vld [vmem:[%s375 + $0xd8] sm:$0xff]
        %v2140 = vld [vmem:[%s375 + $0xe0] sm:$0xff]
        %v2141 = vld [vmem:[%s375 + $0xe8] sm:$0xff]
        %v2142 = vld [vmem:[%s375 + $0xf0] sm:$0xff]
        %v2143 = vld [vmem:[%s375 + $0xf8] sm:$0xff]
        %v2144 = vld [vmem:[%s375 + $0x100] sm:$0xff]
        %v2145 = vld [vmem:[%s375 + $0x108] sm:$0xff]
        %v2146 = vld [vmem:[%s375 + $0x110] sm:$0xff]
        %v2147 = vld [vmem:[%s375 + $0x118] sm:$0xff]
        %v2148 = vld [vmem:[%s375 + $0x120] sm:$0xff]
        %v2149 = vld [vmem:[%s375 + $0x128] sm:$0xff]
        %v2150 = vld [vmem:[%s375 + $0x130] sm:$0xff]
        %v2151 = vld [vmem:[%s375 + $0x138] sm:$0xff]
        %v2152 = vld [vmem:[%s375 + $0x140] sm:$0xff]
        %v2153 = vld [vmem:[%s375 + $0x148] sm:$0xff]
        %v2154 = vld [vmem:[%s375 + $0x150] sm:$0xff]
        %v2155 = vld [vmem:[%s375 + $0x158] sm:$0xff]
        %v2156 = vld [vmem:[%s375 + $0x160] sm:$0xff]
        %v2157 = vld [vmem:[%s375 + $0x168] sm:$0xff]
        %v2158 = vld [vmem:[%s375 + $0x170] sm:$0xff]
        %v2159 = vld [vmem:[%s375 + $0x178] sm:$0xff]
        %v2160 = vld [vmem:[%s375 + $0x180] sm:$0xff]
        %v2161 = vld [vmem:[%s375 + $0x188] sm:$0xff]
        %v2162 = vld [vmem:[%s375 + $0x190] sm:$0xff]
        %v2163 = vld [vmem:[%s375 + $0x198] sm:$0xff]
        %v2164 = vld [vmem:[%s375 + $0x1a0] sm:$0xff]
        %v2165 = vld [vmem:[%s375 + $0x1a8] sm:$0xff]
        %v2166 = vld [vmem:[%s375 + $0x1b0] sm:$0xff]
        %v2167 = vld [vmem:[%s375 + $0x1b8] sm:$0xff]
        %v2168 = vld [vmem:[%s375 + $0x1c0] sm:$0xff]
        %v2169 = vld [vmem:[%s375 + $0x1c8] sm:$0xff]
        %v2170 = vld [vmem:[%s375 + $0x1d0] sm:$0xff]
        %v2171 = vld [vmem:[%s375 + $0x1d8] sm:$0xff]
        %v2172 = vld [vmem:[%s375 + $0x1e0] sm:$0xff]
        %v2173 = vld [vmem:[%s375 + $0x1e8] sm:$0xff]
        %v2174 = vld [vmem:[%s375 + $0x1f0] sm:$0xff]
        %v2175 = vld [vmem:[%s375 + $0x1f8] sm:$0xff]
        %v2176 = vpack.c.bf16 %v2113, %v2112
        %v2177 = vpack.c.bf16 %v2115, %v2114
        %v2178 = vpack.c.bf16 %v2117, %v2116
        %v2179 = vpack.c.bf16 %v2119, %v2118
        %v2180 = vpack.c.bf16 %v2121, %v2120
        %v2181 = vpack.c.bf16 %v2123, %v2122
        %v2182 = vpack.c.bf16 %v2125, %v2124
        %v2183 = vpack.c.bf16 %v2127, %v2126
        %v2184 = vpack.c.bf16 %v2129, %v2128
        %v2185 = vpack.c.bf16 %v2131, %v2130
        %v2186 = vpack.c.bf16 %v2133, %v2132
        %v2187 = vpack.c.bf16 %v2135, %v2134
        %v2188 = vpack.c.bf16 %v2137, %v2136
        %v2189 = vpack.c.bf16 %v2139, %v2138
        %v2190 = vpack.c.bf16 %v2141, %v2140
        %v2191 = vpack.c.bf16 %v2143, %v2142
        %v2192 = vpack.c.bf16 %v2145, %v2144
        %v2193 = vpack.c.bf16 %v2147, %v2146
        %v2194 = vpack.c.bf16 %v2149, %v2148
        %v2195 = vpack.c.bf16 %v2151, %v2150
        %v2196 = vpack.c.bf16 %v2153, %v2152
        %v2197 = vpack.c.bf16 %v2155, %v2154
        %v2198 = vpack.c.bf16 %v2157, %v2156
        %v2199 = vpack.c.bf16 %v2159, %v2158
        %v2200 = vpack.c.bf16 %v2161, %v2160
        %v2201 = vpack.c.bf16 %v2163, %v2162
        %v2202 = vpack.c.bf16 %v2165, %v2164
        %v2203 = vpack.c.bf16 %v2167, %v2166
        %v2204 = vpack.c.bf16 %v2169, %v2168
        %v2205 = vpack.c.bf16 %v2171, %v2170
        %v2206 = vpack.c.bf16 %v2173, %v2172
        %v2207 = vpack.c.bf16 %v2175, %v2174
        %2208 = vxpose.xlu0.c.b16.start [1/8] %v2176, 128
        %2209 = vxpose.xlu0.c.b16.cont [2/8] %v2177, 128
        %2210 = vxpose.xlu0.c.b16.cont [3/8] %v2178, 128
        %2211 = vxpose.xlu0.c.b16.cont [4/8] %v2179, 128
        %2212 = vxpose.xlu0.c.b16.cont [5/8] %v2180, 128
        %2213 = vxpose.xlu0.c.b16.cont [6/8] %v2181, 128
        %2214 = vxpose.xlu0.c.b16.cont [7/8] %v2182, 128
        %2215 = vxpose.xlu0.c.b16.end [8/8] %v2183, 128
        %v2216 = vpop.trf.xlu0
        %v2217 = vpop.trf.xlu0
        %v2218 = vpop.trf.xlu0
        %v2219 = vpop.trf.xlu0
        %v2220 = vpop.trf.xlu0
        %v2221 = vpop.trf.xlu0
        %v2222 = vpop.trf.xlu0
        %v2223 = vpop.trf.xlu0
        %2224 = vmatprep.subr.bf16.mxu0 0
        %2225 = vmatpush1.bf16.xpose.msra.mxu0 %v2080
        %2226 = vmatprep.subr.bf16.mxu0 0
        %2227 = vmatpush1.bf16.xpose.msra.mxu0 %v2081
        %2228 = vmatprep.subr.bf16.mxu0 0
        %2229 = vmatpush1.bf16.xpose.msra.mxu0 %v2082
        %2230 = vmatprep.subr.bf16.mxu0 0
        %2231 = vmatpush1.bf16.xpose.msra.mxu0 %v2083
        %2232 = vmatprep.subr.bf16.mxu0 0
        %2233 = vmatpush1.bf16.xpose.msra.mxu0 %v2084
        %2234 = vmatprep.subr.bf16.mxu0 0
        %2235 = vmatpush1.bf16.xpose.msra.mxu0 %v2085
        %2236 = vmatprep.subr.bf16.mxu0 0
        %2237 = vmatpush1.bf16.xpose.msra.mxu0 %v2086
        %2238 = vmatprep.subr.bf16.mxu0 0
        %2239 = vmatpush1.bf16.xpose.msra.mxu0 %v2087
        %2240 = vmatprep.subr.bf16.mxu0 0
        %2241 = vmatpush1.bf16.xpose.msra.mxu0 0
        %2242 = vmatprep.subr.bf16.mxu0 0
        %2243 = vmatpush1.bf16.xpose.msra.mxu0 0
        %2244 = vmatprep.subr.bf16.mxu0 0
        %2245 = vmatpush1.bf16.xpose.msra.mxu0 0
        %2246 = vmatprep.subr.bf16.mxu0 0
        %2247 = vmatpush1.bf16.xpose.msra.mxu0 0
        %2248 = vmatprep.subr.bf16.mxu0 0
        %2249 = vmatpush1.bf16.xpose.msra.mxu0 0
        %2250 = vmatprep.subr.bf16.mxu0 0
        %2251 = vmatpush1.bf16.xpose.msra.mxu0 0
        %2252 = vmatprep.subr.bf16.mxu0 0
        %2253 = vmatpush1.bf16.xpose.msra.mxu0 0
        %2254 = vmatprep.subr.bf16.mxu0 0
        %2255 = vmatpush1.bf16.xpose.msra.mxu0 0
        %2256 = vmatprep.mubr.bf16.mxu0 0
        %2257 = vmatmul.mubr.bf16.gmra.mrb[0].mxu0 %v2216
        %v2258 = vpop.f32.mrb[0].mxu0
        %v2259 = vadd.f32 0.0, %v2258
        %v2260 = vpop.f32.mrb[0].mxu0
        %v2261 = vpop.f32.mrb[0].mxu0
        %v2262 = vadd.f32 0.0, %v2261
        %v2263 = vpop.f32.mrb[0].mxu0
        %2264 = vdwg.mxu0
        %2265 = vxpose.xlu0.c.b16.start [1/8] %v2184, 128
        %2266 = vxpose.xlu0.c.b16.cont [2/8] %v2185, 128
        %2267 = vxpose.xlu0.c.b16.cont [3/8] %v2186, 128
        %2268 = vxpose.xlu0.c.b16.cont [4/8] %v2187, 128
        %2269 = vxpose.xlu0.c.b16.cont [5/8] %v2188, 128
        %2270 = vxpose.xlu0.c.b16.cont [6/8] %v2189, 128
        %2271 = vxpose.xlu0.c.b16.cont [7/8] %v2190, 128
        %2272 = vxpose.xlu0.c.b16.end [8/8] %v2191, 128
        %v2273 = vpop.trf.xlu0
        %v2274 = vpop.trf.xlu0
        %v2275 = vpop.trf.xlu0
        %v2276 = vpop.trf.xlu0
        %v2277 = vpop.trf.xlu0
        %v2278 = vpop.trf.xlu0
        %v2279 = vpop.trf.xlu0
        %v2280 = vpop.trf.xlu0
        %2281 = vmatprep.subr.bf16.mxu0 0
        %2282 = vmatpush1.bf16.xpose.msra.mxu0 %v2088
        %2283 = vmatprep.subr.bf16.mxu0 0
        %2284 = vmatpush1.bf16.xpose.msra.mxu0 %v2089
        %2285 = vmatprep.subr.bf16.mxu0 0
        %2286 = vmatpush1.bf16.xpose.msra.mxu0 %v2090
        %2287 = vmatprep.subr.bf16.mxu0 0
        %2288 = vmatpush1.bf16.xpose.msra.mxu0 %v2091
        %2289 = vmatprep.subr.bf16.mxu0 0
        %2290 = vmatpush1.bf16.xpose.msra.mxu0 %v2092
        %2291 = vmatprep.subr.bf16.mxu0 0
        %2292 = vmatpush1.bf16.xpose.msra.mxu0 %v2093
        %2293 = vmatprep.subr.bf16.mxu0 0
        %2294 = vmatpush1.bf16.xpose.msra.mxu0 %v2094
        %2295 = vmatprep.subr.bf16.mxu0 0
        %2296 = vmatpush1.bf16.xpose.msra.mxu0 %v2095
        %2297 = vmatprep.subr.bf16.mxu0 0
        %2298 = vmatpush1.bf16.xpose.msra.mxu0 0
        %2299 = vmatprep.subr.bf16.mxu0 0
        %2300 = vmatpush1.bf16.xpose.msra.mxu0 0
        %2301 = vmatprep.subr.bf16.mxu0 0
        %2302 = vmatpush1.bf16.xpose.msra.mxu0 0
        %2303 = vmatprep.subr.bf16.mxu0 0
        %2304 = vmatpush1.bf16.xpose.msra.mxu0 0
        %2305 = vmatprep.subr.bf16.mxu0 0
        %2306 = vmatpush1.bf16.xpose.msra.mxu0 0
        %2307 = vmatprep.subr.bf16.mxu0 0
        %2308 = vmatpush1.bf16.xpose.msra.mxu0 0
        %2309 = vmatprep.subr.bf16.mxu0 0
        %2310 = vmatpush1.bf16.xpose.msra.mxu0 0
        %2311 = vmatprep.subr.bf16.mxu0 0
        %2312 = vmatpush1.bf16.xpose.msra.mxu0 0
        %2313 = vmatprep.mubr.bf16.mxu0 0
        %2314 = vmatmul.mubr.bf16.gmra.mrb[0].mxu0 %v2273
        %v2315 = vpop.f32.mrb[0].mxu0
        %v2316 = vadd.f32 0.0, %v2315
        %v2317 = vpop.f32.mrb[0].mxu0
        %v2318 = vpop.f32.mrb[0].mxu0
        %v2319 = vadd.f32 0.0, %v2318
        %v2320 = vpop.f32.mrb[0].mxu0
        %2321 = vdwg.mxu0
        %2322 = vxpose.xlu0.c.b16.start [1/8] %v2192, 128
        %2323 = vxpose.xlu0.c.b16.cont [2/8] %v2193, 128
        %2324 = vxpose.xlu0.c.b16.cont [3/8] %v2194, 128
        %2325 = vxpose.xlu0.c.b16.cont [4/8] %v2195, 128
        %2326 = vxpose.xlu0.c.b16.cont [5/8] %v2196, 128
        %2327 = vxpose.xlu0.c.b16.cont [6/8] %v2197, 128
        %2328 = vxpose.xlu0.c.b16.cont [7/8] %v2198, 128
        %2329 = vxpose.xlu0.c.b16.end [8/8] %v2199, 128
        %v2330 = vpop.trf.xlu0
        %v2331 = vpop.trf.xlu0
        %v2332 = vpop.trf.xlu0
        %v2333 = vpop.trf.xlu0
        %v2334 = vpop.trf.xlu0
        %v2335 = vpop.trf.xlu0
        %v2336 = vpop.trf.xlu0
        %v2337 = vpop.trf.xlu0
        %2338 = vmatprep.subr.bf16.mxu0 0
        %2339 = vmatpush1.bf16.xpose.msra.mxu0 %v2096
        %2340 = vmatprep.subr.bf16.mxu0 0
        %2341 = vmatpush1.bf16.xpose.msra.mxu0 %v2097
        %2342 = vmatprep.subr.bf16.mxu0 0
        %2343 = vmatpush1.bf16.xpose.msra.mxu0 %v2098
        %2344 = vmatprep.subr.bf16.mxu0 0
        %2345 = vmatpush1.bf16.xpose.msra.mxu0 %v2099
        %2346 = vmatprep.subr.bf16.mxu0 0
        %2347 = vmatpush1.bf16.xpose.msra.mxu0 %v2100
        %2348 = vmatprep.subr.bf16.mxu0 0
        %2349 = vmatpush1.bf16.xpose.msra.mxu0 %v2101
        %2350 = vmatprep.subr.bf16.mxu0 0
        %2351 = vmatpush1.bf16.xpose.msra.mxu0 %v2102
        %2352 = vmatprep.subr.bf16.mxu0 0
        %2353 = vmatpush1.bf16.xpose.msra.mxu0 %v2103
        %2354 = vmatprep.subr.bf16.mxu0 0
        %2355 = vmatpush1.bf16.xpose.msra.mxu0 0
        %2356 = vmatprep.subr.bf16.mxu0 0
        %2357 = vmatpush1.bf16.xpose.msra.mxu0 0
        %2358 = vmatprep.subr.bf16.mxu0 0
        %2359 = vmatpush1.bf16.xpose.msra.mxu0 0
        %2360 = vmatprep.subr.bf16.mxu0 0
        %2361 = vmatpush1.bf16.xpose.msra.mxu0 0
        %2362 = vmatprep.subr.bf16.mxu0 0
        %2363 = vmatpush1.bf16.xpose.msra.mxu0 0
        %2364 = vmatprep.subr.bf16.mxu0 0
        %2365 = vmatpush1.bf16.xpose.msra.mxu0 0
        %2366 = vmatprep.subr.bf16.mxu0 0
        %2367 = vmatpush1.bf16.xpose.msra.mxu0 0
        %2368 = vmatprep.subr.bf16.mxu0 0
        %2369 = vmatpush1.bf16.xpose.msra.mxu0 0
        %2370 = vmatprep.mubr.bf16.mxu0 0
        %2371 = vmatmul.mubr.bf16.gmra.mrb[0].mxu0 %v2330
        %v2372 = vpop.f32.mrb[0].mxu0
        %v2373 = vadd.f32 0.0, %v2372
        %v2374 = vpop.f32.mrb[0].mxu0
        %v2375 = vpop.f32.mrb[0].mxu0
        %v2376 = vadd.f32 0.0, %v2375
        %v2377 = vpop.f32.mrb[0].mxu0
        %2378 = vdwg.mxu0
        %2379 = vxpose.xlu0.c.b16.start [1/8] %v2200, 128
        %2380 = vxpose.xlu0.c.b16.cont [2/8] %v2201, 128
        %2381 = vxpose.xlu0.c.b16.cont [3/8] %v2202, 128
        %2382 = vxpose.xlu0.c.b16.cont [4/8] %v2203, 128
        %2383 = vxpose.xlu0.c.b16.cont [5/8] %v2204, 128
        %2384 = vxpose.xlu0.c.b16.cont [6/8] %v2205, 128
        %2385 = vxpose.xlu0.c.b16.cont [7/8] %v2206, 128
        %2386 = vxpose.xlu0.c.b16.end [8/8] %v2207, 128
        %v2387 = vpop.trf.xlu0
        %v2388 = vpop.trf.xlu0
        %v2389 = vpop.trf.xlu0
        %v2390 = vpop.trf.xlu0
        %v2391 = vpop.trf.xlu0
        %v2392 = vpop.trf.xlu0
        %v2393 = vpop.trf.xlu0
        %v2394 = vpop.trf.xlu0
        %2395 = vmatprep.subr.bf16.mxu0 0
        %2396 = vmatpush1.bf16.xpose.msra.mxu0 %v2104
        %2397 = vmatprep.subr.bf16.mxu0 0
        %2398 = vmatpush1.bf16.xpose.msra.mxu0 %v2105
        %2399 = vmatprep.subr.bf16.mxu0 0
        %2400 = vmatpush1.bf16.xpose.msra.mxu0 %v2106
        %2401 = vmatprep.subr.bf16.mxu0 0
        %2402 = vmatpush1.bf16.xpose.msra.mxu0 %v2107
        %2403 = vmatprep.subr.bf16.mxu0 0
        %2404 = vmatpush1.bf16.xpose.msra.mxu0 %v2108
        %2405 = vmatprep.subr.bf16.mxu0 0
        %2406 = vmatpush1.bf16.xpose.msra.mxu0 %v2109
        %2407 = vmatprep.subr.bf16.mxu0 0
        %2408 = vmatpush1.bf16.xpose.msra.mxu0 %v2110
        %2409 = vmatprep.subr.bf16.mxu0 0
        %2410 = vmatpush1.bf16.xpose.msra.mxu0 %v2111
        %2411 = vmatprep.subr.bf16.mxu0 0
        %2412 = vmatpush1.bf16.xpose.msra.mxu0 0
        %2413 = vmatprep.subr.bf16.mxu0 0
        %2414 = vmatpush1.bf16.xpose.msra.mxu0 0
        %2415 = vmatprep.subr.bf16.mxu0 0
        %2416 = vmatpush1.bf16.xpose.msra.mxu0 0
        %2417 = vmatprep.subr.bf16.mxu0 0
        %2418 = vmatpush1.bf16.xpose.msra.mxu0 0
        %2419 = vmatprep.subr.bf16.mxu0 0
        %2420 = vmatpush1.bf16.xpose.msra.mxu0 0
        %2421 = vmatprep.subr.bf16.mxu0 0
        %2422 = vmatpush1.bf16.xpose.msra.mxu0 0
        %2423 = vmatprep.subr.bf16.mxu0 0
        %2424 = vmatpush1.bf16.xpose.msra.mxu0 0
        %2425 = vmatprep.subr.bf16.mxu0 0
        %2426 = vmatpush1.bf16.xpose.msra.mxu0 0
        %2427 = vmatprep.mubr.bf16.mxu0 0
        %2428 = vmatmul.mubr.bf16.gmra.mrb[0].mxu0 %v2387
        %v2429 = vpop.f32.mrb[0].mxu0
        %v2430 = vadd.f32 0.0, %v2429
        %v2431 = vpop.f32.mrb[0].mxu0
        %v2432 = vpop.f32.mrb[0].mxu0
        %v2433 = vadd.f32 0.0, %v2432
        %v2434 = vpop.f32.mrb[0].mxu0
        %2435 = vdwg.mxu0
        %2436 = vst [vmem:[%s343] sm:$0xff] %v2259
        %2437 = vst [vmem:[%s343 + $0x8] sm:$0xff] %v2262
        %2438 = vst [vmem:[%s343 + $0x10] sm:$0xff] %v2316
        %2439 = vst [vmem:[%s343 + $0x18] sm:$0xff] %v2319
        %2440 = vst [vmem:[%s343 + $0x20] sm:$0xff] %v2373
        %2441 = vst [vmem:[%s343 + $0x28] sm:$0xff] %v2376
        %2442 = vst [vmem:[%s343 + $0x30] sm:$0xff] %v2430
        %2443 = vst [vmem:[%s343 + $0x38] sm:$0xff] %v2433
        %s2444 = sand.u32 %s179, 1
        %s2445 = scalar_lea.sflag [#allocation3], %s2444
        %s2446 = sand.u32 %s179, 1
        %s2447 = smul.addr %s2446, 64
        %s2448 = scalar_lea.vmem [#allocation2], %s2447
        // Predicated region
        $region41: #{tpu_custom_call.1} parent=39 // pred_check
          %p2449 = pneg %p189
        $region42: #{tpu_custom_call.1} parent=39 // pred_check_branch
          %2451 = sbr.rel (%p2449) target = $region44
        $region43: #{tpu_custom_call.1} parent=39 // pred_region
          %s2452 = smul.u32 4, %s24
          %s2454 = ssub.s32 1024, 1024
          %2455 = vsyncadd %s2445, %s2454
          %s2456 = smul.addr %s2452, 2
          %s2457 = smul.addr %s23, 16
          %s2458 = sadd.s32 %s2456, %s2457
          %s2459 = smul.addr %s2458, 128
          %s2460 = scalar_lea.hbm %s5, %s2459
          %s2461 = sshll.u32 %s2448, 4
          %s2462 = int_to_ptr.vmem [resolvable:$true] %s2461
          %2467 = dma.vmem_to_hbm [thread:$0]  %s2462, 1024, %s2460, %s2445, 128, 128, 8
        $region44: #{tpu_custom_call.1} parent=39 // pred_fallthru
          _
      $region40: #{tpu_custom_call.1} parent=5 // pred_fallthru
        _
      %p2468 = scmp.le.s32.totalorder 2, %s14
      // Predicated region
      $region45: #{tpu_custom_call.1} parent=5 // pred_check
        %p2469 = pneg %p2468
      $region46: #{tpu_custom_call.1} parent=5 // pred_check_branch
        %2471 = sbr.rel (%p2469) target = $region48
      $region47: #{tpu_custom_call.1} parent=5 // pred_region
        %s2472 = ssub.s32 %s14, 2
        // Predicated region
        $region49: #{tpu_custom_call.1} parent=47 // pred_check
          %p2473 = pneg %p195
        $region50: #{tpu_custom_call.1} parent=47 // pred_check_branch
          %2475 = sbr.rel (%p2473) target = $region52
        $region51: #{tpu_custom_call.1} parent=47 // pred_region
          %s2476 = sand.u32 %s180, 1
          %s2477 = scalar_lea.sflag [#allocation3], %s2476
          %s2478 = sand.u32 %s180, 1
          %s2479 = smul.addr %s2478, 64
          %s2480 = scalar_lea.vmem [#allocation2], %s2479
          %2481 = dma.done %s2477, 1024
        $region52: #{tpu_custom_call.1} parent=47 // pred_fallthru
          _
      $region48: #{tpu_custom_call.1} parent=5 // pred_fallthru
        _
    $region6: #{tpu_custom_call.1} parent=1 // loop_footer
      %s18 = sadd.s32 1, %s14
    $region7: #{tpu_custom_call.1} parent=1 // loop_footer_branch
      %13 = sbr.rel target = $region3
    $region8: #{tpu_custom_call.1} parent=1 // loop_exit
      _
    %2482 = vsyncpa [#allocation3], 1
    %s2483 = scalar_lea.sflag [#allocation3], 1
    %2484 = vsyncpa %s2483, 1

</llo_original>
